<compile_context>
chip_gen: v6e
topology: v6e:2x2x1
jax: 0.10.0
libtpu: 0.0.40
codegen_flags: <defaults>
</compile_context>

<pallas_src>
import functools

import jax
import jax.numpy as jnp
from jax.experimental import pallas as pl
from jax.experimental.pallas import tpu as pltpu


# ----------------------------- glue helpers -----------------------------


def _nearest_resize_nhwc(x, out_h, out_w):
    """Matches torch.nn.functional.interpolate(mode='nearest'): src = floor(dst*in/out)."""
    n, h, w, c = x.shape
    hi = (jnp.arange(out_h) * h) // out_h
    wi = (jnp.arange(out_w) * w) // out_w
    return x[:, hi][:, :, wi]


def _nchw_to_nhwc(x):
    return jnp.transpose(x, (0, 2, 3, 1))


def _nhwc_to_nchw(x):
    return jnp.transpose(x, (0, 3, 1, 2))


def _round_up(v, m=128):
    return ((v + m - 1) // m) * m


def _lane_pad(c):
    """Lane-pad channels to a multiple of 128 only when already >=128; tiny channel
    counts keep native width (masked stores are cheaper than 8-16x extra HBM bytes)."""
    return _round_up(c, 128) if c >= 128 else c


def _pad_to(a, axis, target):
    if a.shape[axis] == target:
        return a
    pad = [(0, 0)] * a.ndim
    pad[axis] = (0, target - a.shape[axis])
    return jnp.pad(a, pad)


def _pick_row_tile(rows, cap=2048):
    """Largest multiple-of-8 divisor of `rows` that is <= cap and leaves >= 2 grid steps
    (so both v7x TensorCores get work); falls back to a single step."""
    upper = min(cap, rows // 2)
    start = upper - upper % 8
    for tm in range(start, 7, -8):
        if rows % tm == 0:
            return tm
    return rows


# ----------------------------- Pallas kernels -----------------------------


def _conv1_att_fuse_kernel(x_ref, y_ref, w1_ref, b1_ref, way_ref, o_ref, *, att_col):
    """conv1 (1x1, BN scale folded) with the x-side attention logits folded into two
    extra columns of the same matmul, + y-side attention dot + sigmoid + blend.

    x_ref:(TM,Cin) bf16   y_ref:(TM,Cs) bf16   w1_ref:(Cin,W1out) bf16
    b1_ref:(1,W1out) f32  way_ref:(Cs,2) bf16  o_ref:(TM,Cs) bf16
    att logits live in columns [att_col, att_col+2) of the main matmul output.
    """
    full = jnp.dot(x_ref[...], w1_ref[...],
                   preferred_element_type=jnp.float32) + b1_ref[...]
    y = y_ref[...]
    att = (full[:, att_col:att_col + 2]
           + jnp.dot(y, way_ref[...], preferred_element_type=jnp.float32))
    z = jax.nn.sigmoid(att)                                 # (TM, 2) f32, EUP
    xm = full[:, :o_ref.shape[-1]]
    o_ref[...] = (xm * z[:, 0:1]
                  + y.astype(jnp.float32) * z[:, 1:2]).astype(o_ref.dtype)


def _conv1_kernel(x_ref, w1_ref, b1_ref, o_ref):
    """conv1 (1x1, BN scale folded) + bias only (fuse=False path)."""
    o_ref[...] = (jnp.dot(x_ref[...], w1_ref[...],
                          preferred_element_type=jnp.float32)
                  + b1_ref[...]).astype(o_ref.dtype)


def _shift_rows(xf, off):
    """s[r] = xf[r + off] where in range, zero-filled rows elsewhere (static off)."""
    if off == 0:
        return xf
    c = xf.shape[-1]
    z = jnp.zeros((abs(off), c), xf.dtype)
    if off > 0:
        return jnp.concatenate([xf[off:], z], axis=0)
    return jnp.concatenate([z, xf[:off]], axis=0)


def _conv3x3_kernel(x_ref, w_ref, b_ref, m_ref, o_ref, *, H, W):
    """conv2: 3x3, stride 1, pad 1, one image per grid step, flat layout.

    x_ref:(1,H*W,C) bf16   w_ref:(3, 3*C, Cout) bf16 (dy-major, (dx, cin) flattened)
    b_ref:(1,Cout) f32     m_ref:(H*W, 2) bf16 edge masks [j != 0, j != W-1]
    o_ref:(1,H*W,Cout) f32

    Per dy a dx-im2col slab (H*W, 3*C) is built from flat shifts: zero-filled rows cover
    the i-boundary, the precomputed masks cover the j-boundary.  The conv is then just
    3 MXU matmuls (K=3*C) accumulated in registers — no halo scratch, no scratch zeroing,
    and no per-tap f32 accumulator read-modify-write.
    """
    del H  # documented above; only W enters the tap offsets
    xf = x_ref[0]                                           # (H*W, C) bf16
    acc = None
    for dy in (-1, 0, 1):
        cols = []
        for dx in (-1, 0, 1):
            t = _shift_rows(xf, dy * W + dx)
            if dx == -1:
                t = t * m_ref[:, 0:1]
            elif dx == 1:
                t = t * m_ref[:, 1:2]
            cols.append(t)
        slab = jnp.concatenate(cols, axis=1)                # (H*W, 3*C) bf16
        part = jnp.dot(slab, w_ref[dy + 1],
                       preferred_element_type=jnp.float32)
        acc = part if acc is None else acc + part
    o_ref[0] = (acc + b_ref[...]).astype(o_ref.dtype)


# ----------------------------- wrapper -----------------------------


def abf_forward(x_nchw, y_nchw, shape, out_shape, params, fuse=True):
    """Mirrors ABF.forward (eval-mode BN). Returns (y, x) in NCHW like the module."""
    n, cin, h, w = x_nchw.shape
    cmid = params["w1"].shape[1]
    cout = params["w2"].shape[-1]
    cin_p, cmid_s, cout_p = _lane_pad(cin), _lane_pad(cmid), _lane_pad(cout)

    # ---- fold BN (eval mode) scale into conv1 weights ----
    w1s = params["w1"] * params["s1"]                       # (cin, cmid) f32
    b1 = params["b1"]                                       # (1, cmid)   f32

    # ---- inputs: NCHW -> NHWC boundary glue, channel pad, bf16, flat rows ----
    x = _pad_to(_nchw_to_nhwc(x_nchw).astype(jnp.bfloat16), 3, cin_p)
    rows = n * h * w
    x_flat = x.reshape(rows, cin_p)
    tm = _pick_row_tile(rows)
    grid = (rows // tm,)

    if fuse:
        # Fold the x-side attention weights (and both biases) into two extra columns of
        # the conv1 weight: one main matmul produces xm and the x-attention logits.
        att_w = w1s @ params["wax"]                         # (cin, 2)
        att_b = b1 @ params["wax"] + params["ba"]           # (1, 2)
        if cmid_s >= cmid + 2:
            w1out, att_col = cmid_s, cmid                   # reuse padded columns
        else:
            w1out, att_col = cmid_s + 2, cmid_s             # append two columns
        w1e = jnp.zeros((cin_p, w1out), jnp.float32)
        w1e = w1e.at[:cin, :cmid].set(w1s).at[:cin, att_col:att_col + 2].set(att_w)
        w1e = w1e.astype(jnp.bfloat16)
        b1e = jnp.zeros((1, w1out), jnp.float32)
        b1e = b1e.at[:, :cmid].set(b1).at[:, att_col:att_col + 2].set(att_b)
        wayp = _pad_to(params["way"], 0, cmid_s).astype(jnp.bfloat16)

        y = _nchw_to_nhwc(y_nchw).astype(jnp.bfloat16)
        y = _nearest_resize_nhwc(y, shape, shape)           # F.interpolate nearest (glue)
        y_flat = _pad_to(y, 3, cmid_s).reshape(rows, cmid_s)

        fused = pl.pallas_call(
            functools.partial(_conv1_att_fuse_kernel, att_col=att_col),
            out_shape=jax.ShapeDtypeStruct((rows, cmid_s), jnp.bfloat16),
            grid=grid,
            in_specs=[
                pl.BlockSpec((tm, cin_p), lambda i: (i, 0)),
                pl.BlockSpec((tm, cmid_s), lambda i: (i, 0)),
                pl.BlockSpec((cin_p, w1out), lambda i: (0, 0)),
                pl.BlockSpec((1, w1out), lambda i: (0, 0)),
                pl.BlockSpec((cmid_s, 2), lambda i: (0, 0)),
            ],
            out_specs=pl.BlockSpec((tm, cmid_s), lambda i: (i, 0)),
            compiler_params=pltpu.CompilerParams(
                dimension_semantics=("parallel",)),
        )(x_flat, y_flat, w1e, b1e, wayp)
    else:
        w1p = _pad_to(_pad_to(w1s, 0, cin_p), 1, cmid_s).astype(jnp.bfloat16)
        b1p = _pad_to(b1, 1, cmid_s)
        fused = pl.pallas_call(
            _conv1_kernel,
            out_shape=jax.ShapeDtypeStruct((rows, cmid_s), jnp.bfloat16),
            grid=grid,
            in_specs=[
                pl.BlockSpec((tm, cin_p), lambda i: (i, 0)),
                pl.BlockSpec((cin_p, cmid_s), lambda i: (0, 0)),
                pl.BlockSpec((1, cmid_s), lambda i: (0, 0)),
            ],
            out_specs=pl.BlockSpec((tm, cmid_s), lambda i: (i, 0)),
            compiler_params=pltpu.CompilerParams(
                dimension_semantics=("parallel",)),
        )(x_flat, w1p, b1p)

    x_mid_p = fused.reshape(n, h, w, cmid_s)                # NHWC, bf16

    if x_mid_p.shape[2] != out_shape:                       # x.shape[-1] != out_shape
        x_mid_p = _nearest_resize_nhwc(x_mid_p, out_shape, out_shape)
    hc = wc = out_shape
    hw = hc * wc

    # ---- conv2 weights: fold BN scale, pad channels, dy-major (3, 3*C, Cout) ----
    w2s = params["w2"] * params["s2"].reshape(1, 1, 1, cout)
    w2p = _pad_to(_pad_to(w2s, 2, cmid_s), 3, cout_p)
    w2r = w2p.reshape(3, 3 * cmid_s, cout_p).astype(jnp.bfloat16)
    b2p = _pad_to(params["b2"], 1, cout_p)                  # (1, cout_p) f32

    # edge-column masks for the dx = -1 / +1 taps (precomputed, constant across batch)
    jj = jnp.arange(hw, dtype=jnp.int32) % wc
    mask = jnp.stack([jj != 0, jj != wc - 1], axis=1).astype(jnp.bfloat16)

    x2_flat = x_mid_p.reshape(n, hw, cmid_s)                # bf16, lane dense

    y_out_flat = pl.pallas_call(
        functools.partial(_conv3x3_kernel, H=hc, W=wc),
        out_shape=jax.ShapeDtypeStruct((n, hw, cout_p), jnp.float32),
        grid=(n,),
        in_specs=[
            pl.BlockSpec((1, hw, cmid_s), lambda b: (b, 0, 0)),
            pl.BlockSpec((3, 3 * cmid_s, cout_p), lambda b: (0, 0, 0)),
            pl.BlockSpec((1, cout_p), lambda b: (0, 0)),
            pl.BlockSpec((hw, 2), lambda b: (0, 0)),
        ],
        out_specs=pl.BlockSpec((1, hw, cout_p), lambda b: (b, 0, 0)),
        compiler_params=pltpu.CompilerParams(
            dimension_semantics=("parallel",),
            vmem_limit_bytes=48 * 1024 * 1024),
    )(x2_flat, w2r, b2p, mask)

    y_out = _nhwc_to_nchw(y_out_flat.reshape(n, hc, wc, cout_p)[..., :cout])
    x_mid = _nhwc_to_nchw(x_mid_p[..., :cmid].astype(jnp.float32))
    return y_out, x_mid


# ----------------------------- parameter init -----------------------------


def init_abf_params(key, in_channel, mid_channel, out_channel, fuse=True):
    ks = jax.random.split(key, 12)
    eps = 1e-5

    # conv1: kaiming_uniform(a=1) -> bound = sqrt(3 / fan_in), fan_in = in_channel
    b = (3.0 / in_channel) ** 0.5
    w1 = jax.random.uniform(ks[0], (in_channel, mid_channel), jnp.float32, -b, b)

    # conv2: kaiming_uniform(a=1), fan_in = mid_channel * 9; stored as HWIO
    b = (3.0 / (mid_channel * 9)) ** 0.5
    w2 = jax.random.uniform(ks[1], (3, 3, mid_channel, out_channel), jnp.float32, -b, b)

    def bn_scale_bias(kg, kb, km, kv, c):
        gamma = 1.0 + 0.1 * jax.random.normal(kg, (c,), jnp.float32)
        beta = 0.1 * jax.random.normal(kb, (c,), jnp.float32)
        rmean = 0.05 * jax.random.normal(km, (c,), jnp.float32)
        rvar = 1.0 + 0.1 * jax.random.uniform(kv, (c,), jnp.float32)
        scale = gamma / jnp.sqrt(rvar + eps)
        bias = beta - rmean * scale
        return scale.reshape(1, c), bias.reshape(1, c)

    s1, b1 = bn_scale_bias(ks[2], ks[3], ks[4], ks[5], mid_channel)
    s2, b2 = bn_scale_bias(ks[6], ks[7], ks[8], ks[9], out_channel)

    params = {"w1": w1, "s1": s1, "b1": b1, "w2": w2, "s2": s2, "b2": b2}

    if fuse:
        # att_conv: nn.Conv2d(2*mid, 2, 1) default init, fan_in = 2*mid
        fan = 2 * mid_channel
        bd = 1.0 / fan ** 0.5
        watt = jax.random.uniform(ks[10], (fan, 2), jnp.float32, -bd, bd)
        batt = jax.random.uniform(ks[11], (2,), jnp.float32, -bd, bd)
        params["wax"] = watt[:mid_channel]      # acts on conv1 output x
        params["way"] = watt[mid_channel:]      # acts on interpolated y
        params["ba"] = batt.reshape(1, 2)
    return params


# ----------------------------- pure-JAX reference -----------------------------


def reference_forward(x_nchw, y_nchw, shape, out_shape, params, fuse=True):
    x = _nchw_to_nhwc(x_nchw).astype(jnp.float32)
    xm = jnp.einsum("nhwc,cd->nhwd", x, params["w1"]) * params["s1"] + params["b1"]
    if fuse:
        y = _nearest_resize_nhwc(_nchw_to_nhwc(y_nchw).astype(jnp.float32), shape, shape)
        att = (jnp.einsum("nhwc,cd->nhwd", xm, params["wax"])
               + jnp.einsum("nhwc,cd->nhwd", y, params["way"]) + params["ba"])
        z = jax.nn.sigmoid(att)
        xm = xm * z[..., 0:1] + y * z[..., 1:2]
    if xm.shape[2] != out_shape:
        xm = _nearest_resize_nhwc(xm, out_shape, out_shape)
    yc = jax.lax.conv_general_dilated(
        xm, params["w2"], (1, 1), "SAME",
        dimension_numbers=("NHWC", "HWIO", "NHWC"))
    yo = yc * params["s2"] + params["b2"]
    return _nhwc_to_nchw(yo), _nhwc_to_nchw(xm)


# ----------------------------- main -----------------------------


if __name__ == "__main__":
    key = jax.random.PRNGKey(0)
    n, in_channel, mid_channel, out_channel = 2, 8, 16, 16
    h = w = 16
    shape = 16          # target for y's nearest interpolation (== h)
    out_shape = 16      # == w, so the second interpolation branch is skipped

    kx, ky, kp = jax.random.split(key, 3)
    x = jax.random.normal(kx, (n, in_channel, h, w), jnp.float32)         # NCHW
    y = jax.random.normal(ky, (n, mid_channel, 8, 8), jnp.float32)        # NCHW, smaller spatial

    # fused (attention) path
    params = init_abf_params(kp, in_channel, mid_channel, out_channel, fuse=True)
    y_out, x_mid = abf_forward(x, y, shape, out_shape, params, fuse=True)
    jax.block_until_ready((y_out, x_mid))

    y_ref, x_ref = reference_forward(x, y, shape, out_shape, params, fuse=True)
    assert y_out.shape == (n, out_channel, out_shape, out_shape)
    assert x_mid.shape == (n, mid_channel, out_shape, out_shape)
    assert jnp.allclose(y_out, y_ref, atol=5e-2, rtol=5e-2)
    assert jnp.allclose(x_mid, x_ref, atol=5e-2, rtol=5e-2)

    # non-fused path (fuse=False)
    params_nf = init_abf_params(kp, in_channel, mid_channel, out_channel, fuse=False)
    y_nf, x_nf = abf_forward(x, None, shape, out_shape, params_nf, fuse=False)
    jax.block_until_ready((y_nf, x_nf))
    y_nf_ref, x_nf_ref = reference_forward(x, None, shape, out_shape, params_nf, fuse=False)
    assert jnp.allclose(y_nf, y_nf_ref, atol=5e-2, rtol=5e-2)
    assert jnp.allclose(x_nf, x_nf_ref, atol=5e-2, rtol=5e-2)

    print("KERNEL_OK")
</pallas_src>

<mosaic_0001>
module attributes {stable_mosaic.version = 11 : i64} {
  func.func @_conv1_att_fuse_kernel(%arg0: i32, %arg1: memref<256x8xbf16, #tpu.memory_space<vmem>>, %arg2: memref<256x16xbf16, #tpu.memory_space<vmem>>, %arg3: memref<8x18xbf16, #tpu.memory_space<vmem>>, %arg4: memref<1x18xf32, #tpu.memory_space<vmem>>, %arg5: memref<16x2xbf16, #tpu.memory_space<vmem>>, %arg6: memref<256x16xbf16, #tpu.memory_space<vmem>>) attributes {dimension_semantics = [#tpu.dimension_semantics<parallel>], iteration_bounds = array<i64: 2>, scalar_prefetch = 0 : i64, scratch_operands = 0 : i64, tpu.core_type = #tpu.core_type<tc>, window_params = [{transform_indices = @transform_0, window_bounds = array<i64: 256, 8>}, {transform_indices = @transform_1, window_bounds = array<i64: 256, 16>}, {pipeline_mode = #tpu.pipeline_mode<synchronous>, transform_indices = @transform_2, window_bounds = array<i64: 8, 18>}, {pipeline_mode = #tpu.pipeline_mode<synchronous>, transform_indices = @transform_3, window_bounds = array<i64: 1, 18>}, {pipeline_mode = #tpu.pipeline_mode<synchronous>, transform_indices = @transform_4, window_bounds = array<i64: 16, 2>}, {transform_indices = @transform_5, window_bounds = array<i64: 256, 16>}]} {
    %c0 = arith.constant 0 : index
    %c0_0 = arith.constant 0 : index
    %0 = vector.load %arg1[%c0, %c0_0] : memref<256x8xbf16, #tpu.memory_space<vmem>>, vector<256x8xbf16>
    %c0_1 = arith.constant 0 : index
    %c0_2 = arith.constant 0 : index
    %1 = vector.load %arg3[%c0_1, %c0_2] : memref<8x18xbf16, #tpu.memory_space<vmem>>, vector<8x18xbf16>
    %cst = arith.constant dense<0.000000e+00> : vector<256x18xf32>
    %2 = tpu.matmul %0, %1, %cst {dimension_numbers = #tpu.dot_dimension_numbers<[1], [0], [0], [1], [0, 0, 1, 1], [], []>} : vector<256x8xbf16>, vector<8x18xbf16>, vector<256x18xf32> -> vector<256x18xf32>
    %c0_3 = arith.constant 0 : index
    %c0_4 = arith.constant 0 : index
    %3 = vector.load %arg4[%c0_3, %c0_4] : memref<1x18xf32, #tpu.memory_space<vmem>>, vector<1x18xf32>
    %4 = vector.broadcast %3 : vector<1x18xf32> to vector<256x18xf32>
    %5 = arith.addf %2, %4 : vector<256x18xf32>
    %c0_5 = arith.constant 0 : index
    %c0_6 = arith.constant 0 : index
    %6 = vector.load %arg2[%c0_5, %c0_6] : memref<256x16xbf16, #tpu.memory_space<vmem>>, vector<256x16xbf16>
    %7 = vector.extract_strided_slice %5 {offsets = [0, 16], sizes = [256, 2], strides = [1, 1]} : vector<256x18xf32> to vector<256x2xf32>
    %c0_7 = arith.constant 0 : index
    %c0_8 = arith.constant 0 : index
    %8 = vector.load %arg5[%c0_7, %c0_8] : memref<16x2xbf16, #tpu.memory_space<vmem>>, vector<16x2xbf16>
    %cst_9 = arith.constant dense<0.000000e+00> : vector<256x2xf32>
    %9 = tpu.matmul %6, %8, %cst_9 {dimension_numbers = #tpu.dot_dimension_numbers<[1], [0], [0], [1], [0, 0, 1, 1], [], []>} : vector<256x16xbf16>, vector<16x2xbf16>, vector<256x2xf32> -> vector<256x2xf32>
    %10 = arith.addf %7, %9 : vector<256x2xf32>
    %11 = arith.negf %10 : vector<256x2xf32>
    %12 = math.exp %11 : vector<256x2xf32>
    %cst_10 = arith.constant 1.000000e+00 : f32
    %13 = vector.broadcast %cst_10 : f32 to vector<256x2xf32>
    %14 = arith.addf %13, %12 : vector<256x2xf32>
    %15 = arith.divf %13, %14 : vector<256x2xf32>
    %16 = vector.extract_strided_slice %5 {offsets = [0, 0], sizes = [256, 16], strides = [1, 1]} : vector<256x18xf32> to vector<256x16xf32>
    %17 = vector.extract_strided_slice %15 {offsets = [0, 0], sizes = [256, 1], strides = [1, 1]} : vector<256x2xf32> to vector<256x1xf32>
    %18 = vector.broadcast %17 : vector<256x1xf32> to vector<256x16xf32>
    %19 = arith.mulf %16, %18 : vector<256x16xf32>
    %20 = arith.extf %6 : vector<256x16xbf16> to vector<256x16xf32>
    %21 = vector.extract_strided_slice %15 {offsets = [0, 1], sizes = [256, 1], strides = [1, 1]} : vector<256x2xf32> to vector<256x1xf32>
    %22 = vector.broadcast %21 : vector<256x1xf32> to vector<256x16xf32>
    %23 = arith.mulf %20, %22 : vector<256x16xf32>
    %24 = arith.addf %19, %23 : vector<256x16xf32>
    %25 = arith.truncf %24 : vector<256x16xf32> to vector<256x16xbf16>
    %c0_11 = arith.constant 0 : index
    %c0_12 = arith.constant 0 : index
    %26 = vector.load %arg6[%c0_11, %c0_12] : memref<256x16xbf16, #tpu.memory_space<vmem>>, vector<256x16xbf16>
    tpu.vector_store %arg6[%c0_11, %c0_12], %25 {strides = array<i32>} : memref<256x16xbf16, #tpu.memory_space<vmem>>, vector<256x16xbf16>,
    return
  }
  func.func @transform_0(%arg0: i32) -> (i32, i32) {
    %c0_i32 = arith.constant 0 : i32
    %c0_i32_0 = arith.constant 0 : i32
    return %arg0, %c0_i32 : i32, i32
  }
  func.func @transform_1(%arg0: i32) -> (i32, i32) {
    %c0_i32 = arith.constant 0 : i32
    %c0_i32_0 = arith.constant 0 : i32
    return %arg0, %c0_i32 : i32, i32
  }
  func.func @transform_2(%arg0: i32) -> (i32, i32) {
    %c0_i32 = arith.constant 0 : i32
    %c0_i32_0 = arith.constant 0 : i32
    %c0_i32_1 = arith.constant 0 : i32
    return %c0_i32, %c0_i32_0 : i32, i32
  }
  func.func @transform_3(%arg0: i32) -> (i32, i32) {
    %c0_i32 = arith.constant 0 : i32
    %c0_i32_0 = arith.constant 0 : i32
    %c0_i32_1 = arith.constant 0 : i32
    return %c0_i32, %c0_i32_0 : i32, i32
  }
  func.func @transform_4(%arg0: i32) -> (i32, i32) {
    %c0_i32 = arith.constant 0 : i32
    %c0_i32_0 = arith.constant 0 : i32
    %c0_i32_1 = arith.constant 0 : i32
    return %c0_i32, %c0_i32_0 : i32, i32
  }
  func.func @transform_5(%arg0: i32) -> (i32, i32) {
    %c0_i32 = arith.constant 0 : i32
    %c0_i32_0 = arith.constant 0 : i32
    return %arg0, %c0_i32 : i32, i32
  }
}

</mosaic_0001>

<llo_original>
// kernel: tpu_custom_call.1
$region0: #{tpu_custom_call.1}
  #allocation0 [shape = 'u32[]', space=smem, size = 0x4, offset = 0x4, fixed_abs, tag = 'smem constant byte address 0x4 - core index']
  #allocation1 [shape = 'u32[144,128]{1,0:T(1,128)}', space=vmem, size = 0x12000, scoped, tag = 'internal scratch']
  %s0 = inlined_call_operand.vmem [shape: bf16[512,8], index: 0, kind: input, shape index: {}]
  %s1 = inlined_call_operand.vmem [shape: bf16[512,16], index: 1, kind: input, shape index: {}]
  %s2 = inlined_call_operand.vmem [shape: bf16[8,18], index: 2, kind: input, shape index: {}]
  %s3 = inlined_call_operand.vmem [shape: f32[1,18], index: 3, kind: input, shape index: {}]
  %s4 = inlined_call_operand.vmem [shape: bf16[16,2], index: 4, kind: input, shape index: {}]
  %s5 = inlined_call_operand.vmem [shape: bf16[512,16], index: 5, kind: output, shape index: {}]
  %s6 = sld [smem:[#allocation0]]
  $region53: #{tpu_custom_call.1} parent=0
    _
  %s8 = ssub.s32 1, %s6
  %s9 = scalar_select 0, %s8, %s6
  loop: start=0, step=1, limit=4
  $region2: #{tpu_custom_call.1} parent=0 // loop_pre_header
    _
  $region3: #{tpu_custom_call.1} parent=0 // loop_header
    %s11 = sphi 0, %s15
    %p12 = scmp.ge.s32.totalorder %s11, 4
    %s21 = sphi 0, %s23
    %s24 = sphi 0, %s21
    %s25 = sphi 0, %s24
    %s41 = sphi 0, %s25
    %s47 = sphi 0, %s49
    %s50 = sphi 0, %s47
    %s51 = sphi 0, %s50
    %s67 = sphi 0, %s51
    %s71 = sphi 0, %s71
    %s73 = sphi 0, %s71
    %s74 = sphi 0, %s73
    %s88 = sphi 0, %s74
    %s92 = sphi 0, %s92
    %s94 = sphi 0, %s92
    %s95 = sphi 0, %s94
    %s109 = sphi 0, %s95
    %s113 = sphi 0, %s113
    %s115 = sphi 0, %s113
    %s116 = sphi 0, %s115
    %s130 = sphi 0, %s116
    %s136 = sphi 0, %s138
    %s139 = sphi 0, %s136
    %s140 = sphi 0, %s139
    %s156 = sphi 0, %s140
  $region4: #{tpu_custom_call.1} parent=0 // loop_header_branch
    %14 = sbr.rel (%p12) target = $region8
  $region5: #{tpu_custom_call.1} parent=0 // loop_body
    %s16 = ssub.s32 %s11, 1
    %s17 = ssub.s32 %s11, 2
    %s18 = sadd.s32 %s11, 1
    %s19 = ssub.s32 %s11, %s18
    %p20 = scmp.eq.s32.totalorder %s19, 0
    %s22 = sadd.s32 %s21, 1
    %s23 = scalar_select %p20, %s21, %s22
    %p26 = pneg %p20
    %p27 = scmp.eq.s32.totalorder %s11, 1
    %p28 = por %p26, %p27
    %p29 = scmp.ne.s32.totalorder %s21, %s24
    %p30 = scmp.eq.s32.totalorder %s11, 0
    %p31 = por %p29, %p30
    %p32 = scmp.ne.s32.totalorder %s21, %s24
    %p33 = scmp.eq.s32.totalorder %s16, 1
    %p34 = por %p32, %p33
    %p35 = scmp.ne.s32.totalorder %s24, %s25
    %p36 = scmp.eq.s32.totalorder %s16, 0
    %p37 = por %p35, %p36
    %p38 = scmp.ne.s32.totalorder %s24, %s25
    %p39 = scmp.eq.s32.totalorder %s17, 1
    %p40 = por %p38, %p39
    %p42 = scmp.ne.s32.totalorder %s25, %s41
    %p43 = scmp.eq.s32.totalorder %s17, 0
    %p44 = por %p42, %p43
    %s45 = ssub.s32 %s11, %s18
    %p46 = scmp.eq.s32.totalorder %s45, 0
    %s48 = sadd.s32 %s47, 1
    %s49 = scalar_select %p46, %s47, %s48
    %p52 = pneg %p46
    %p53 = scmp.eq.s32.totalorder %s11, 1
    %p54 = por %p52, %p53
    %p55 = scmp.ne.s32.totalorder %s47, %s50
    %p56 = scmp.eq.s32.totalorder %s11, 0
    %p57 = por %p55, %p56
    %p58 = scmp.ne.s32.totalorder %s47, %s50
    %p59 = scmp.eq.s32.totalorder %s16, 1
    %p60 = por %p58, %p59
    %p61 = scmp.ne.s32.totalorder %s50, %s51
    %p62 = scmp.eq.s32.totalorder %s16, 0
    %p63 = por %p61, %p62
    %p64 = scmp.ne.s32.totalorder %s50, %s51
    %p65 = scmp.eq.s32.totalorder %s17, 1
    %p66 = por %p64, %p65
    %p68 = scmp.ne.s32.totalorder %s51, %s67
    %p69 = scmp.eq.s32.totalorder %s17, 0
    %p70 = por %p68, %p69
    %s72 = sadd.s32 %s71, 1
    %p75 = scmp.eq.s32.totalorder %s11, 1
    %p76 = scmp.ne.s32.totalorder %s71, %s73
    %p77 = scmp.eq.s32.totalorder %s11, 0
    %p78 = por %p76, %p77
    %p79 = scmp.ne.s32.totalorder %s71, %s73
    %p80 = scmp.eq.s32.totalorder %s16, 1
    %p81 = por %p79, %p80
    %p82 = scmp.ne.s32.totalorder %s73, %s74
    %p83 = scmp.eq.s32.totalorder %s16, 0
    %p84 = por %p82, %p83
    %p85 = scmp.ne.s32.totalorder %s73, %s74
    %p86 = scmp.eq.s32.totalorder %s17, 1
    %p87 = por %p85, %p86
    %p89 = scmp.ne.s32.totalorder %s74, %s88
    %p90 = scmp.eq.s32.totalorder %s17, 0
    %p91 = por %p89, %p90
    %s93 = sadd.s32 %s92, 1
    %p96 = scmp.eq.s32.totalorder %s11, 1
    %p97 = scmp.ne.s32.totalorder %s92, %s94
    %p98 = scmp.eq.s32.totalorder %s11, 0
    %p99 = por %p97, %p98
    %p100 = scmp.ne.s32.totalorder %s92, %s94
    %p101 = scmp.eq.s32.totalorder %s16, 1
    %p102 = por %p100, %p101
    %p103 = scmp.ne.s32.totalorder %s94, %s95
    %p104 = scmp.eq.s32.totalorder %s16, 0
    %p105 = por %p103, %p104
    %p106 = scmp.ne.s32.totalorder %s94, %s95
    %p107 = scmp.eq.s32.totalorder %s17, 1
    %p108 = por %p106, %p107
    %p110 = scmp.ne.s32.totalorder %s95, %s109
    %p111 = scmp.eq.s32.totalorder %s17, 0
    %p112 = por %p110, %p111
    %s114 = sadd.s32 %s113, 1
    %p117 = scmp.eq.s32.totalorder %s11, 1
    %p118 = scmp.ne.s32.totalorder %s113, %s115
    %p119 = scmp.eq.s32.totalorder %s11, 0
    %p120 = por %p118, %p119
    %p121 = scmp.ne.s32.totalorder %s113, %s115
    %p122 = scmp.eq.s32.totalorder %s16, 1
    %p123 = por %p121, %p122
    %p124 = scmp.ne.s32.totalorder %s115, %s116
    %p125 = scmp.eq.s32.totalorder %s16, 0
    %p126 = por %p124, %p125
    %p127 = scmp.ne.s32.totalorder %s115, %s116
    %p128 = scmp.eq.s32.totalorder %s17, 1
    %p129 = por %p127, %p128
    %p131 = scmp.ne.s32.totalorder %s116, %s130
    %p132 = scmp.eq.s32.totalorder %s17, 0
    %p133 = por %p131, %p132
    %s134 = ssub.s32 %s11, %s18
    %p135 = scmp.eq.s32.totalorder %s134, 0
    %s137 = sadd.s32 %s136, 1
    %s138 = scalar_select %p135, %s136, %s137
    %p141 = pneg %p135
    %p142 = scmp.eq.s32.totalorder %s11, 1
    %p143 = por %p141, %p142
    %p144 = scmp.ne.s32.totalorder %s136, %s139
    %p145 = scmp.eq.s32.totalorder %s11, 0
    %p146 = por %p144, %p145
    %p147 = scmp.ne.s32.totalorder %s136, %s139
    %p148 = scmp.eq.s32.totalorder %s16, 1
    %p149 = por %p147, %p148
    %p150 = scmp.ne.s32.totalorder %s139, %s140
    %p151 = scmp.eq.s32.totalorder %s16, 0
    %p152 = por %p150, %p151
    %p153 = scmp.ne.s32.totalorder %s139, %s140
    %p154 = scmp.eq.s32.totalorder %s17, 1
    %p155 = por %p153, %p154
    %p157 = scmp.ne.s32.totalorder %s140, %s156
    %p158 = scmp.eq.s32.totalorder %s17, 0
    %p159 = por %p157, %p158
    %p160 = scmp.le.s32.totalorder 1, %s11
    %p161 = scmp.lt.s32.totalorder %s11, 3
    %p162 = pnand %p160, %p161
    %p163 = pneg %p162
    // Predicated region
    $region9: #{tpu_custom_call.1} parent=5 // pred_check
      _
    $region10: #{tpu_custom_call.1} parent=5 // pred_check_branch
      %165 = sbr.rel (%p162) target = $region12
    $region11: #{tpu_custom_call.1} parent=5 // pred_region
      %s166 = ssub.s32 %s11, 1
      // Predicated region
      $region13: #{tpu_custom_call.1} parent=11 // pred_check
        %p167 = pneg %p84
      $region14: #{tpu_custom_call.1} parent=11 // pred_check_branch
        %169 = sbr.rel (%p167) target = $region16
      $region15: #{tpu_custom_call.1} parent=11 // pred_region
        _
      $region16: #{tpu_custom_call.1} parent=11 // pred_fallthru
        _
      // Predicated region
      $region17: #{tpu_custom_call.1} parent=11 // pred_check
        %p170 = pneg %p105
      $region18: #{tpu_custom_call.1} parent=11 // pred_check_branch
        %172 = sbr.rel (%p170) target = $region20
      $region19: #{tpu_custom_call.1} parent=11 // pred_region
        _
      $region20: #{tpu_custom_call.1} parent=11 // pred_fallthru
        _
      // Predicated region
      $region21: #{tpu_custom_call.1} parent=11 // pred_check
        %p173 = pneg %p126
      $region22: #{tpu_custom_call.1} parent=11 // pred_check_branch
        %175 = sbr.rel (%p173) target = $region24
      $region23: #{tpu_custom_call.1} parent=11 // pred_region
        _
      $region24: #{tpu_custom_call.1} parent=11 // pred_fallthru
        _
    $region12: #{tpu_custom_call.1} parent=5 // pred_fallthru
      _
    %p176 = scmp.lt.s32.totalorder %s11, 2
    // Predicated region
    $region25: #{tpu_custom_call.1} parent=5 // pred_check
      %p177 = pneg %p176
    $region26: #{tpu_custom_call.1} parent=5 // pred_check_branch
      %179 = sbr.rel (%p177) target = $region28
    $region27: #{tpu_custom_call.1} parent=5 // pred_region
      // Predicated region
      $region29: #{tpu_custom_call.1} parent=27 // pred_check
        %p180 = pneg %p31
      $region30: #{tpu_custom_call.1} parent=27 // pred_check_branch
        %182 = sbr.rel (%p180) target = $region32
      $region31: #{tpu_custom_call.1} parent=27 // pred_region
        %s183 = smul.u32 32, %s11
        %p184 = scmp.lt.s32.totalorder %s183, 63
        %s185 = scalar_select %p184, %s183, 63
        %s186 = smul.addr %s185, 4
        %s187 = scalar_lea.vmem %s0, %s186
        %s188 = smul.u32 32, %s11
      $region32: #{tpu_custom_call.1} parent=27 // pred_fallthru
        _
      // Predicated region
      $region33: #{tpu_custom_call.1} parent=27 // pred_check
        %p189 = pneg %p57
      $region34: #{tpu_custom_call.1} parent=27 // pred_check_branch
        %191 = sbr.rel (%p189) target = $region36
      $region35: #{tpu_custom_call.1} parent=27 // pred_region
        %s192 = smul.u32 32, %s11
        %p193 = scmp.lt.s32.totalorder %s192, 63
        %s194 = scalar_select %p193, %s192, 63
        %s195 = smul.addr %s194, 4
        %s196 = scalar_lea.vmem %s1, %s195
        %s197 = smul.u32 32, %s11
      $region36: #{tpu_custom_call.1} parent=27 // pred_fallthru
        _
    $region28: #{tpu_custom_call.1} parent=5 // pred_fallthru
      _
    %p198 = scmp.le.s32.totalorder 1, %s11
    %p199 = scmp.lt.s32.totalorder %s11, 3
    %p200 = pnand %p198, %p199
    %p201 = pneg %p200
    // Predicated region
    $region37: #{tpu_custom_call.1} parent=5 // pred_check
      _
    $region38: #{tpu_custom_call.1} parent=5 // pred_check_branch
      %203 = sbr.rel (%p200) target = $region40
    $region39: #{tpu_custom_call.1} parent=5 // pred_region
      %s204 = ssub.s32 %s11, 1
      %s205 = smul.u32 32, %s16
      %p206 = scmp.lt.s32.totalorder %s205, 63
      %s207 = scalar_select %p206, %s205, 63
      %s208 = smul.addr %s207, 4
      %s209 = scalar_lea.vmem %s0, %s208
      %p210 = pneg %p37
      %p211 = pneg %p34
      %s212 = smul.u32 32, %s16
      %p213 = scmp.lt.s32.totalorder %s212, 63
      %s214 = scalar_select %p213, %s212, 63
      %s215 = smul.addr %s214, 4
      %s216 = scalar_lea.vmem %s1, %s215
      %p217 = pneg %p63
      %p218 = pneg %p60
      %p219 = pneg %p84
      %p220 = pneg %p81
      %p221 = pneg %p105
      %p222 = pneg %p102
      %p223 = pneg %p126
      %p224 = pneg %p123
      %p225 = pneg %p152
      %p226 = pneg %p149
      %s227 = smul.u32 32, %s16
      %p228 = scmp.lt.s32.totalorder %s227, 63
      %s229 = scalar_select %p228, %s227, 63
      %s230 = smul.addr %s229, 4
      %s231 = scalar_lea.vmem %s5, %s230
      %s232 = smul.u32 32, %s16
      %p233 = scmp.lt.s32.totalorder %s232, 63
      %s234 = scalar_select %p233, %s232, 63
      %s235 = smul.addr %s234, 4
      %s236 = scalar_lea.vmem %s0, %s235
      %s237 = smul.u32 32, %s16
      %s238 = smul.u32 32, %s16
      %p239 = scmp.lt.s32.totalorder %s238, 63
      %s240 = scalar_select %p239, %s238, 63
      %s241 = smul.addr %s240, 4
      %s242 = scalar_lea.vmem %s1, %s241
      %s243 = smul.u32 32, %s16
      %s244 = smul.u32 32, %s16
      %p245 = scmp.lt.s32.totalorder %s244, 63
      %s246 = scalar_select %p245, %s244, 63
      %s247 = smul.addr %s246, 4
      %s248 = scalar_lea.vmem %s5, %s247
      %s249 = smul.u32 32, %s16
      %v251 = vld [vmem:[%s236] sm:$0xf]
      %v252 = vld [vmem:[%s236 + $0x4] sm:$0xf]
      %v253 = vld [vmem:[%s236 + $0x8] sm:$0xf]
      %v254 = vld [vmem:[%s236 + $0xc] sm:$0xf]
      %v255 = vld [vmem:[%s236 + $0x10] sm:$0xf]
      %v256 = vld [vmem:[%s236 + $0x14] sm:$0xf]
      %v257 = vld [vmem:[%s236 + $0x18] sm:$0xf]
      %v258 = vld [vmem:[%s236 + $0x1c] sm:$0xf]
      %v259 = vld [vmem:[%s236 + $0x20] sm:$0xf]
      %v260 = vld [vmem:[%s236 + $0x24] sm:$0xf]
      %v261 = vld [vmem:[%s236 + $0x28] sm:$0xf]
      %v262 = vld [vmem:[%s236 + $0x2c] sm:$0xf]
      %v263 = vld [vmem:[%s236 + $0x30] sm:$0xf]
      %v264 = vld [vmem:[%s236 + $0x34] sm:$0xf]
      %v265 = vld [vmem:[%s236 + $0x38] sm:$0xf]
      %v266 = vld [vmem:[%s236 + $0x3c] sm:$0xf]
      %v267 = vld [vmem:[%s236 + $0x40] sm:$0xf]
      %v268 = vld [vmem:[%s236 + $0x44] sm:$0xf]
      %v269 = vld [vmem:[%s236 + $0x48] sm:$0xf]
      %v270 = vld [vmem:[%s236 + $0x4c] sm:$0xf]
      %v271 = vld [vmem:[%s236 + $0x50] sm:$0xf]
      %v272 = vld [vmem:[%s236 + $0x54] sm:$0xf]
      %v273 = vld [vmem:[%s236 + $0x58] sm:$0xf]
      %v274 = vld [vmem:[%s236 + $0x5c] sm:$0xf]
      %v275 = vld [vmem:[%s236 + $0x60] sm:$0xf]
      %v276 = vld [vmem:[%s236 + $0x64] sm:$0xf]
      %v277 = vld [vmem:[%s236 + $0x68] sm:$0xf]
      %v278 = vld [vmem:[%s236 + $0x6c] sm:$0xf]
      %v279 = vld [vmem:[%s236 + $0x70] sm:$0xf]
      %v280 = vld [vmem:[%s236 + $0x74] sm:$0xf]
      %v281 = vld [vmem:[%s236 + $0x78] sm:$0xf]
      %v282 = vld [vmem:[%s236 + $0x7c] sm:$0xf]
      %v283 = vld [vmem:[%s2] sm:$0xf]
      %v284 = vld [vmem:[%s3] sm:$0x1]
      %v286 = vlaneseq
      %v287 = vshrl.u32 %v286, 7
      %v288 = vsub.s32 0, %v287
      %v289 = vrot.slane %v284, %v288
      %v323 = vunpack.c.l.b16 %v251
      %v324 = vunpack.c.l.b16 %v252
      %v325 = vunpack.c.l.b16 %v253
      %v326 = vunpack.c.l.b16 %v254
      %v327 = vunpack.c.l.b16 %v255
      %v328 = vunpack.c.l.b16 %v256
      %v329 = vunpack.c.l.b16 %v257
      %v330 = vunpack.c.l.b16 %v258
      %v331 = vunpack.c.l.b16 %v259
      %v332 = vunpack.c.l.b16 %v260
      %v333 = vunpack.c.l.b16 %v261
      %v334 = vunpack.c.l.b16 %v262
      %v335 = vunpack.c.l.b16 %v263
      %v336 = vunpack.c.l.b16 %v264
      %v337 = vunpack.c.l.b16 %v265
      %v338 = vunpack.c.l.b16 %v266
      %v339 = vunpack.c.l.b16 %v267
      %v340 = vunpack.c.l.b16 %v268
      %v341 = vunpack.c.l.b16 %v269
      %v342 = vunpack.c.l.b16 %v270
      %v343 = vunpack.c.l.b16 %v271
      %v344 = vunpack.c.l.b16 %v272
      %v345 = vunpack.c.l.b16 %v273
      %v346 = vunpack.c.l.b16 %v274
      %v347 = vunpack.c.l.b16 %v275
      %v348 = vunpack.c.l.b16 %v276
      %v349 = vunpack.c.l.b16 %v277
      %v350 = vunpack.c.l.b16 %v278
      %v351 = vunpack.c.l.b16 %v279
      %v352 = vunpack.c.l.b16 %v280
      %v353 = vunpack.c.l.b16 %v281
      %v354 = vunpack.c.l.b16 %v282
      %v355 = vpack.c.b16 %v324, %v323
      %v356 = vpack.c.b16 %v326, %v325
      %v357 = vpack.c.b16 %v328, %v327
      %v358 = vpack.c.b16 %v330, %v329
      %v359 = vpack.c.b16 %v332, %v331
      %v360 = vpack.c.b16 %v334, %v333
      %v361 = vpack.c.b16 %v336, %v335
      %v362 = vpack.c.b16 %v338, %v337
      %v363 = vpack.c.b16 %v340, %v339
      %v364 = vpack.c.b16 %v342, %v341
      %v365 = vpack.c.b16 %v344, %v343
      %v366 = vpack.c.b16 %v346, %v345
      %v367 = vpack.c.b16 %v348, %v347
      %v368 = vpack.c.b16 %v350, %v349
      %v369 = vpack.c.b16 %v352, %v351
      %v370 = vpack.c.b16 %v354, %v353
      %vm371 = vcmask 64512
      %v373 = vsel %vm371, %v355, 0
      %v376 = vsel %vm371, %v356, 0
      %v379 = vsel %vm371, %v357, 0
      %v382 = vsel %vm371, %v358, 0
      %v385 = vsel %vm371, %v359, 0
      %v388 = vsel %vm371, %v360, 0
      %v391 = vsel %vm371, %v361, 0
      %v394 = vsel %vm371, %v362, 0
      %v397 = vsel %vm371, %v363, 0
      %v400 = vsel %vm371, %v364, 0
      %v403 = vsel %vm371, %v365, 0
      %v406 = vsel %vm371, %v366, 0
      %v409 = vsel %vm371, %v367, 0
      %v412 = vsel %vm371, %v368, 0
      %v415 = vsel %vm371, %v369, 0
      %v418 = vsel %vm371, %v370, 0
      %vm420 = vcmask 1043456
      %v422 = vsel %vm420, %v283, 0
      %424 = vmatprep.subr.bf16.mxu0 0
      %425 = vmatpush1.bf16.msra.mxu0 0
      %426 = vmatprep.subr.bf16.mxu0 0
      %427 = vmatpush1.bf16.msra.mxu0 0
      %428 = vmatprep.subr.bf16.mxu0 0
      %429 = vmatpush1.bf16.msra.mxu0 0
      %430 = vmatprep.subr.bf16.mxu0 0
      %431 = vmatpush1.bf16.msra.mxu0 0
      %432 = vmatprep.subr.bf16.mxu0 0
      %433 = vmatpush1.bf16.msra.mxu0 0
      %434 = vmatprep.subr.bf16.mxu0 0
      %435 = vmatpush1.bf16.msra.mxu0 0
      %436 = vmatprep.subr.bf16.mxu0 0
      %437 = vmatpush1.bf16.msra.mxu0 0
      %438 = vmatprep.subr.bf16.mxu0 0
      %439 = vmatpush1.bf16.msra.mxu0 %v422
      %440 = vmatprep.subr.bf16.mxu0 0
      %441 = vmatpush2.bf16.msra.mxu0 0
      %442 = vmatprep.subr.bf16.mxu0 0
      %443 = vmatpush2.bf16.msra.mxu0 0
      %444 = vmatprep.subr.bf16.mxu0 0
      %445 = vmatpush2.bf16.msra.mxu0 0
      %446 = vmatprep.subr.bf16.mxu0 0
      %447 = vmatpush2.bf16.msra.mxu0 0
      %448 = vmatprep.subr.bf16.mxu0 0
      %449 = vmatpush2.bf16.msra.mxu0 0
      %450 = vmatprep.subr.bf16.mxu0 0
      %451 = vmatpush2.bf16.msra.mxu0 0
      %452 = vmatprep.subr.bf16.mxu0 0
      %453 = vmatpush2.bf16.msra.mxu0 0
      %454 = vmatprep.subr.bf16.mxu0 0
      %455 = vmatpush2.bf16.msra.mxu0 0
      %456 = vmatprep.mubr.bf16.mxu0 0
      %457 = vmatmul.mubr.bf16.gmra.mxu0 %v373
      %v458 = vpop.f32.mrf.mxu0
      %v459 = vadd.f32 %v289, %v458
      %v460 = vpop.f32.mrf.mxu0
      %v461 = vpop.f32.mrf.mxu0
      %v462 = vadd.f32 %v289, %v461
      %v463 = vpop.f32.mrf.mxu0
      %464 = vmatprep.mubr.bf16.mxu0 0
      %465 = vmatmul.mubr.bf16.gmra.mxu0 %v376
      %v466 = vpop.f32.mrf.mxu0
      %v467 = vadd.f32 %v289, %v466
      %v468 = vpop.f32.mrf.mxu0
      %v469 = vpop.f32.mrf.mxu0
      %v470 = vadd.f32 %v289, %v469
      %v471 = vpop.f32.mrf.mxu0
      %472 = vmatprep.mubr.bf16.mxu0 0
      %473 = vmatmul.mubr.bf16.gmra.mxu0 %v379
      %v474 = vpop.f32.mrf.mxu0
      %v475 = vadd.f32 %v289, %v474
      %v476 = vpop.f32.mrf.mxu0
      %v477 = vpop.f32.mrf.mxu0
      %v478 = vadd.f32 %v289, %v477
      %v479 = vpop.f32.mrf.mxu0
      %480 = vmatprep.mubr.bf16.mxu0 0
      %481 = vmatmul.mubr.bf16.gmra.mxu0 %v382
      %v482 = vpop.f32.mrf.mxu0
      %v483 = vadd.f32 %v289, %v482
      %v484 = vpop.f32.mrf.mxu0
      %v485 = vpop.f32.mrf.mxu0
      %v486 = vadd.f32 %v289, %v485
      %v487 = vpop.f32.mrf.mxu0
      %488 = vmatprep.mubr.bf16.mxu0 0
      %489 = vmatmul.mubr.bf16.gmra.mxu0 %v385
      %v490 = vpop.f32.mrf.mxu0
      %v491 = vadd.f32 %v289, %v490
      %v492 = vpop.f32.mrf.mxu0
      %v493 = vpop.f32.mrf.mxu0
      %v494 = vadd.f32 %v289, %v493
      %v495 = vpop.f32.mrf.mxu0
      %496 = vmatprep.mubr.bf16.mxu0 0
      %497 = vmatmul.mubr.bf16.gmra.mxu0 %v388
      %v498 = vpop.f32.mrf.mxu0
      %v499 = vadd.f32 %v289, %v498
      %v500 = vpop.f32.mrf.mxu0
      %v501 = vpop.f32.mrf.mxu0
      %v502 = vadd.f32 %v289, %v501
      %v503 = vpop.f32.mrf.mxu0
      %504 = vmatprep.mubr.bf16.mxu0 0
      %505 = vmatmul.mubr.bf16.gmra.mxu0 %v391
      %v506 = vpop.f32.mrf.mxu0
      %v507 = vadd.f32 %v289, %v506
      %v508 = vpop.f32.mrf.mxu0
      %v509 = vpop.f32.mrf.mxu0
      %v510 = vadd.f32 %v289, %v509
      %v511 = vpop.f32.mrf.mxu0
      %512 = vmatprep.mubr.bf16.mxu0 0
      %513 = vmatmul.mubr.bf16.gmra.mxu0 %v394
      %v514 = vpop.f32.mrf.mxu0
      %v515 = vadd.f32 %v289, %v514
      %v516 = vpop.f32.mrf.mxu0
      %v517 = vpop.f32.mrf.mxu0
      %v518 = vadd.f32 %v289, %v517
      %v519 = vpop.f32.mrf.mxu0
      %520 = vmatprep.mubr.bf16.mxu0 0
      %521 = vmatmul.mubr.bf16.gmra.mxu0 %v397
      %v522 = vpop.f32.mrf.mxu0
      %v523 = vadd.f32 %v289, %v522
      %v524 = vpop.f32.mrf.mxu0
      %v525 = vpop.f32.mrf.mxu0
      %v526 = vadd.f32 %v289, %v525
      %v527 = vpop.f32.mrf.mxu0
      %528 = vmatprep.mubr.bf16.mxu0 0
      %529 = vmatmul.mubr.bf16.gmra.mxu0 %v400
      %v530 = vpop.f32.mrf.mxu0
      %v531 = vadd.f32 %v289, %v530
      %v532 = vpop.f32.mrf.mxu0
      %v533 = vpop.f32.mrf.mxu0
      %v534 = vadd.f32 %v289, %v533
      %v535 = vpop.f32.mrf.mxu0
      %536 = vmatprep.mubr.bf16.mxu0 0
      %537 = vmatmul.mubr.bf16.gmra.mxu0 %v403
      %v538 = vpop.f32.mrf.mxu0
      %v539 = vadd.f32 %v289, %v538
      %v540 = vpop.f32.mrf.mxu0
      %v541 = vpop.f32.mrf.mxu0
      %v542 = vadd.f32 %v289, %v541
      %v543 = vpop.f32.mrf.mxu0
      %544 = vmatprep.mubr.bf16.mxu0 0
      %545 = vmatmul.mubr.bf16.gmra.mxu0 %v406
      %v546 = vpop.f32.mrf.mxu0
      %v547 = vadd.f32 %v289, %v546
      %v548 = vpop.f32.mrf.mxu0
      %v549 = vpop.f32.mrf.mxu0
      %v550 = vadd.f32 %v289, %v549
      %v551 = vpop.f32.mrf.mxu0
      %552 = vmatprep.mubr.bf16.mxu0 0
      %553 = vmatmul.mubr.bf16.gmra.mxu0 %v409
      %v554 = vpop.f32.mrf.mxu0
      %v555 = vadd.f32 %v289, %v554
      %v556 = vpop.f32.mrf.mxu0
      %v557 = vpop.f32.mrf.mxu0
      %v558 = vadd.f32 %v289, %v557
      %v559 = vpop.f32.mrf.mxu0
      %560 = vmatprep.mubr.bf16.mxu0 0
      %561 = vmatmul.mubr.bf16.gmra.mxu0 %v412
      %v562 = vpop.f32.mrf.mxu0
      %v563 = vadd.f32 %v289, %v562
      %v564 = vpop.f32.mrf.mxu0
      %v565 = vpop.f32.mrf.mxu0
      %v566 = vadd.f32 %v289, %v565
      %v567 = vpop.f32.mrf.mxu0
      %568 = vmatprep.mubr.bf16.mxu0 0
      %569 = vmatmul.mubr.bf16.gmra.mxu0 %v415
      %v570 = vpop.f32.mrf.mxu0
      %v571 = vadd.f32 %v289, %v570
      %v572 = vpop.f32.mrf.mxu0
      %v573 = vpop.f32.mrf.mxu0
      %v574 = vadd.f32 %v289, %v573
      %v575 = vpop.f32.mrf.mxu0
      %576 = vmatprep.mubr.bf16.mxu0 0
      %577 = vmatmul.mubr.bf16.gmra.mxu0 %v418
      %v578 = vpop.f32.mrf.mxu0
      %v579 = vadd.f32 %v289, %v578
      %v580 = vpop.f32.mrf.mxu0
      %v581 = vpop.f32.mrf.mxu0
      %v582 = vadd.f32 %v289, %v581
      %v583 = vpop.f32.mrf.mxu0
      %584 = vdwg.mxu0
      %v585 = vld [vmem:[%s242] sm:$0xf]
      %v586 = vld [vmem:[%s242 + $0x4] sm:$0xf]
      %v587 = vld [vmem:[%s242 + $0x8] sm:$0xf]
      %v588 = vld [vmem:[%s242 + $0xc] sm:$0xf]
      %v589 = vld [vmem:[%s242 + $0x10] sm:$0xf]
      %v590 = vld [vmem:[%s242 + $0x14] sm:$0xf]
      %v591 = vld [vmem:[%s242 + $0x18] sm:$0xf]
      %v592 = vld [vmem:[%s242 + $0x1c] sm:$0xf]
      %v593 = vld [vmem:[%s242 + $0x20] sm:$0xf]
      %v594 = vld [vmem:[%s242 + $0x24] sm:$0xf]
      %v595 = vld [vmem:[%s242 + $0x28] sm:$0xf]
      %v596 = vld [vmem:[%s242 + $0x2c] sm:$0xf]
      %v597 = vld [vmem:[%s242 + $0x30] sm:$0xf]
      %v598 = vld [vmem:[%s242 + $0x34] sm:$0xf]
      %v599 = vld [vmem:[%s242 + $0x38] sm:$0xf]
      %v600 = vld [vmem:[%s242 + $0x3c] sm:$0xf]
      %v601 = vld [vmem:[%s242 + $0x40] sm:$0xf]
      %v602 = vld [vmem:[%s242 + $0x44] sm:$0xf]
      %v603 = vld [vmem:[%s242 + $0x48] sm:$0xf]
      %v604 = vld [vmem:[%s242 + $0x4c] sm:$0xf]
      %v605 = vld [vmem:[%s242 + $0x50] sm:$0xf]
      %v606 = vld [vmem:[%s242 + $0x54] sm:$0xf]
      %v607 = vld [vmem:[%s242 + $0x58] sm:$0xf]
      %v608 = vld [vmem:[%s242 + $0x5c] sm:$0xf]
      %v609 = vld [vmem:[%s242 + $0x60] sm:$0xf]
      %v610 = vld [vmem:[%s242 + $0x64] sm:$0xf]
      %v611 = vld [vmem:[%s242 + $0x68] sm:$0xf]
      %v612 = vld [vmem:[%s242 + $0x6c] sm:$0xf]
      %v613 = vld [vmem:[%s242 + $0x70] sm:$0xf]
      %v614 = vld [vmem:[%s242 + $0x74] sm:$0xf]
      %v615 = vld [vmem:[%s242 + $0x78] sm:$0xf]
      %v616 = vld [vmem:[%s242 + $0x7c] sm:$0xf]
      %v617 = vld [vmem:[%s4] sm:$0xf]
      %v618 = vld [vmem:[%s4 + $0x4] sm:$0xf]
      %v651 = vunpack.c.l.b16 %v585
      %v652 = vunpack.c.l.b16 %v586
      %v653 = vunpack.c.l.b16 %v587
      %v654 = vunpack.c.l.b16 %v588
      %v655 = vunpack.c.l.b16 %v589
      %v656 = vunpack.c.l.b16 %v590
      %v657 = vunpack.c.l.b16 %v591
      %v658 = vunpack.c.l.b16 %v592
      %v659 = vunpack.c.l.b16 %v593
      %v660 = vunpack.c.l.b16 %v594
      %v661 = vunpack.c.l.b16 %v595
      %v662 = vunpack.c.l.b16 %v596
      %v663 = vunpack.c.l.b16 %v597
      %v664 = vunpack.c.l.b16 %v598
      %v665 = vunpack.c.l.b16 %v599
      %v666 = vunpack.c.l.b16 %v600
      %v667 = vunpack.c.l.b16 %v601
      %v668 = vunpack.c.l.b16 %v602
      %v669 = vunpack.c.l.b16 %v603
      %v670 = vunpack.c.l.b16 %v604
      %v671 = vunpack.c.l.b16 %v605
      %v672 = vunpack.c.l.b16 %v606
      %v673 = vunpack.c.l.b16 %v607
      %v674 = vunpack.c.l.b16 %v608
      %v675 = vunpack.c.l.b16 %v609
      %v676 = vunpack.c.l.b16 %v610
      %v677 = vunpack.c.l.b16 %v611
      %v678 = vunpack.c.l.b16 %v612
      %v679 = vunpack.c.l.b16 %v613
      %v680 = vunpack.c.l.b16 %v614
      %v681 = vunpack.c.l.b16 %v615
      %v682 = vunpack.c.l.b16 %v616
      %v683 = vpack.c.b16 %v652, %v651
      %v684 = vpack.c.b16 %v654, %v653
      %v685 = vpack.c.b16 %v656, %v655
      %v686 = vpack.c.b16 %v658, %v657
      %v687 = vpack.c.b16 %v660, %v659
      %v688 = vpack.c.b16 %v662, %v661
      %v689 = vpack.c.b16 %v664, %v663
      %v690 = vpack.c.b16 %v666, %v665
      %v691 = vpack.c.b16 %v668, %v667
      %v692 = vpack.c.b16 %v670, %v669
      %v693 = vpack.c.b16 %v672, %v671
      %v694 = vpack.c.b16 %v674, %v673
      %v695 = vpack.c.b16 %v676, %v675
      %v696 = vpack.c.b16 %v678, %v677
      %v697 = vpack.c.b16 %v680, %v679
      %v698 = vpack.c.b16 %v682, %v681
      %v701 = vunpack.c.l.b16 %v617
      %v702 = vunpack.c.l.b16 %v618
      %v703 = vpack.c.b16 %v702, %v701
      %vm705 = vcmask 130048
      %v707 = vsel %vm705, %v683, 0
      %v710 = vsel %vm705, %v684, 0
      %v713 = vsel %vm705, %v685, 0
      %v716 = vsel %vm705, %v686, 0
      %v719 = vsel %vm705, %v687, 0
      %v722 = vsel %vm705, %v688, 0
      %v725 = vsel %vm705, %v689, 0
      %v728 = vsel %vm705, %v690, 0
      %v731 = vsel %vm705, %v691, 0
      %v734 = vsel %vm705, %v692, 0
      %v737 = vsel %vm705, %v693, 0
      %v740 = vsel %vm705, %v694, 0
      %v743 = vsel %vm705, %v695, 0
      %v746 = vsel %vm705, %v696, 0
      %v749 = vsel %vm705, %v697, 0
      %v752 = vsel %vm705, %v698, 0
      %754 = vmatprep.subr.bf16.mxu0 0
      %755 = vmatpush1.bf16.msra.mxu0 0
      %756 = vmatprep.subr.bf16.mxu0 0
      %757 = vmatpush1.bf16.msra.mxu0 0
      %758 = vmatprep.subr.bf16.mxu0 0
      %759 = vmatpush1.bf16.msra.mxu0 0
      %760 = vmatprep.subr.bf16.mxu0 0
      %761 = vmatpush1.bf16.msra.mxu0 0
      %762 = vmatprep.subr.bf16.mxu0 0
      %763 = vmatpush1.bf16.msra.mxu0 0
      %764 = vmatprep.subr.bf16.mxu0 0
      %765 = vmatpush1.bf16.msra.mxu0 0
      %766 = vmatprep.subr.bf16.mxu0 0
      %767 = vmatpush1.bf16.msra.mxu0 0
      %768 = vmatprep.subr.bf16.mxu0 0
      %769 = vmatpush1.bf16.msra.mxu0 %v703
      %770 = vmatprep.subr.bf16.mxu0 0
      %771 = vmatpush2.bf16.msra.mxu0 0
      %772 = vmatprep.subr.bf16.mxu0 0
      %773 = vmatpush2.bf16.msra.mxu0 0
      %774 = vmatprep.subr.bf16.mxu0 0
      %775 = vmatpush2.bf16.msra.mxu0 0
      %776 = vmatprep.subr.bf16.mxu0 0
      %777 = vmatpush2.bf16.msra.mxu0 0
      %778 = vmatprep.subr.bf16.mxu0 0
      %779 = vmatpush2.bf16.msra.mxu0 0
      %780 = vmatprep.subr.bf16.mxu0 0
      %781 = vmatpush2.bf16.msra.mxu0 0
      %782 = vmatprep.subr.bf16.mxu0 0
      %783 = vmatpush2.bf16.msra.mxu0 0
      %784 = vmatprep.subr.bf16.mxu0 0
      %785 = vmatpush2.bf16.msra.mxu0 0
      %786 = vmatprep.mubr.bf16.mxu0 0
      %787 = vmatmul.mubr.bf16.gmra.mxu0 %v707
      %v788 = vpop.f32.mrf.mxu0
      %v789 = vadd.f32 0.0, %v788
      %v790 = vpop.f32.mrf.mxu0
      %v791 = vpop.f32.mrf.mxu0
      %v792 = vadd.f32 0.0, %v791
      %v793 = vpop.f32.mrf.mxu0
      %794 = vmatprep.mubr.bf16.mxu0 0
      %795 = vmatmul.mubr.bf16.gmra.mxu0 %v710
      %v796 = vpop.f32.mrf.mxu0
      %v797 = vadd.f32 0.0, %v796
      %v798 = vpop.f32.mrf.mxu0
      %v799 = vpop.f32.mrf.mxu0
      %v800 = vadd.f32 0.0, %v799
      %v801 = vpop.f32.mrf.mxu0
      %802 = vmatprep.mubr.bf16.mxu0 0
      %803 = vmatmul.mubr.bf16.gmra.mxu0 %v713
      %v804 = vpop.f32.mrf.mxu0
      %v805 = vadd.f32 0.0, %v804
      %v806 = vpop.f32.mrf.mxu0
      %v807 = vpop.f32.mrf.mxu0
      %v808 = vadd.f32 0.0, %v807
      %v809 = vpop.f32.mrf.mxu0
      %810 = vmatprep.mubr.bf16.mxu0 0
      %811 = vmatmul.mubr.bf16.gmra.mxu0 %v716
      %v812 = vpop.f32.mrf.mxu0
      %v813 = vadd.f32 0.0, %v812
      %v814 = vpop.f32.mrf.mxu0
      %v815 = vpop.f32.mrf.mxu0
      %v816 = vadd.f32 0.0, %v815
      %v817 = vpop.f32.mrf.mxu0
      %818 = vmatprep.mubr.bf16.mxu0 0
      %819 = vmatmul.mubr.bf16.gmra.mxu0 %v719
      %v820 = vpop.f32.mrf.mxu0
      %v821 = vadd.f32 0.0, %v820
      %v822 = vpop.f32.mrf.mxu0
      %v823 = vpop.f32.mrf.mxu0
      %v824 = vadd.f32 0.0, %v823
      %v825 = vpop.f32.mrf.mxu0
      %826 = vmatprep.mubr.bf16.mxu0 0
      %827 = vmatmul.mubr.bf16.gmra.mxu0 %v722
      %v828 = vpop.f32.mrf.mxu0
      %v829 = vadd.f32 0.0, %v828
      %v830 = vpop.f32.mrf.mxu0
      %v831 = vpop.f32.mrf.mxu0
      %v832 = vadd.f32 0.0, %v831
      %v833 = vpop.f32.mrf.mxu0
      %834 = vmatprep.mubr.bf16.mxu0 0
      %835 = vmatmul.mubr.bf16.gmra.mxu0 %v725
      %v836 = vpop.f32.mrf.mxu0
      %v837 = vadd.f32 0.0, %v836
      %v838 = vpop.f32.mrf.mxu0
      %v839 = vpop.f32.mrf.mxu0
      %v840 = vadd.f32 0.0, %v839
      %v841 = vpop.f32.mrf.mxu0
      %842 = vmatprep.mubr.bf16.mxu0 0
      %843 = vmatmul.mubr.bf16.gmra.mxu0 %v728
      %v844 = vpop.f32.mrf.mxu0
      %v845 = vadd.f32 0.0, %v844
      %v846 = vpop.f32.mrf.mxu0
      %v847 = vpop.f32.mrf.mxu0
      %v848 = vadd.f32 0.0, %v847
      %v849 = vpop.f32.mrf.mxu0
      %850 = vmatprep.mubr.bf16.mxu0 0
      %851 = vmatmul.mubr.bf16.gmra.mxu0 %v731
      %v852 = vpop.f32.mrf.mxu0
      %v853 = vadd.f32 0.0, %v852
      %v854 = vpop.f32.mrf.mxu0
      %v855 = vpop.f32.mrf.mxu0
      %v856 = vadd.f32 0.0, %v855
      %v857 = vpop.f32.mrf.mxu0
      %858 = vmatprep.mubr.bf16.mxu0 0
      %859 = vmatmul.mubr.bf16.gmra.mxu0 %v734
      %v860 = vpop.f32.mrf.mxu0
      %v861 = vadd.f32 0.0, %v860
      %v862 = vpop.f32.mrf.mxu0
      %v863 = vpop.f32.mrf.mxu0
      %v864 = vadd.f32 0.0, %v863
      %v865 = vpop.f32.mrf.mxu0
      %866 = vmatprep.mubr.bf16.mxu0 0
      %867 = vmatmul.mubr.bf16.gmra.mxu0 %v737
      %v868 = vpop.f32.mrf.mxu0
      %v869 = vadd.f32 0.0, %v868
      %v870 = vpop.f32.mrf.mxu0
      %v871 = vpop.f32.mrf.mxu0
      %v872 = vadd.f32 0.0, %v871
      %v873 = vpop.f32.mrf.mxu0
      %874 = vmatprep.mubr.bf16.mxu0 0
      %875 = vmatmul.mubr.bf16.gmra.mxu0 %v740
      %v876 = vpop.f32.mrf.mxu0
      %v877 = vadd.f32 0.0, %v876
      %v878 = vpop.f32.mrf.mxu0
      %v879 = vpop.f32.mrf.mxu0
      %v880 = vadd.f32 0.0, %v879
      %v881 = vpop.f32.mrf.mxu0
      %882 = vmatprep.mubr.bf16.mxu0 0
      %883 = vmatmul.mubr.bf16.gmra.mxu0 %v743
      %v884 = vpop.f32.mrf.mxu0
      %v885 = vadd.f32 0.0, %v884
      %v886 = vpop.f32.mrf.mxu0
      %v887 = vpop.f32.mrf.mxu0
      %v888 = vadd.f32 0.0, %v887
      %v889 = vpop.f32.mrf.mxu0
      %890 = vmatprep.mubr.bf16.mxu0 0
      %891 = vmatmul.mubr.bf16.gmra.mxu0 %v746
      %v892 = vpop.f32.mrf.mxu0
      %v893 = vadd.f32 0.0, %v892
      %v894 = vpop.f32.mrf.mxu0
      %v895 = vpop.f32.mrf.mxu0
      %v896 = vadd.f32 0.0, %v895
      %v897 = vpop.f32.mrf.mxu0
      %898 = vmatprep.mubr.bf16.mxu0 0
      %899 = vmatmul.mubr.bf16.gmra.mxu0 %v749
      %v900 = vpop.f32.mrf.mxu0
      %v901 = vadd.f32 0.0, %v900
      %v902 = vpop.f32.mrf.mxu0
      %v903 = vpop.f32.mrf.mxu0
      %v904 = vadd.f32 0.0, %v903
      %v905 = vpop.f32.mrf.mxu0
      %906 = vmatprep.mubr.bf16.mxu0 0
      %907 = vmatmul.mubr.bf16.gmra.mxu0 %v752
      %v908 = vpop.f32.mrf.mxu0
      %v909 = vadd.f32 0.0, %v908
      %v910 = vpop.f32.mrf.mxu0
      %v911 = vpop.f32.mrf.mxu0
      %v912 = vadd.f32 0.0, %v911
      %v913 = vpop.f32.mrf.mxu0
      %914 = vdwg.mxu0
      %947 = vrot.lane.b32.xlu0 %v789, 16
      %v948 = vpop.permute.xlu0 %947
      %949 = vrot.lane.b32.xlu0 %v792, 16
      %v950 = vpop.permute.xlu0 %949
      %951 = vrot.lane.b32.xlu0 %v797, 16
      %v952 = vpop.permute.xlu0 %951
      %953 = vrot.lane.b32.xlu0 %v800, 16
      %v954 = vpop.permute.xlu0 %953
      %955 = vrot.lane.b32.xlu0 %v805, 16
      %v956 = vpop.permute.xlu0 %955
      %957 = vrot.lane.b32.xlu0 %v808, 16
      %v958 = vpop.permute.xlu0 %957
      %959 = vrot.lane.b32.xlu0 %v813, 16
      %v960 = vpop.permute.xlu0 %959
      %961 = vrot.lane.b32.xlu0 %v816, 16
      %v962 = vpop.permute.xlu0 %961
      %963 = vrot.lane.b32.xlu0 %v821, 16
      %v964 = vpop.permute.xlu0 %963
      %965 = vrot.lane.b32.xlu0 %v824, 16
      %v966 = vpop.permute.xlu0 %965
      %967 = vrot.lane.b32.xlu0 %v829, 16
      %v968 = vpop.permute.xlu0 %967
      %969 = vrot.lane.b32.xlu0 %v832, 16
      %v970 = vpop.permute.xlu0 %969
      %971 = vrot.lane.b32.xlu0 %v837, 16
      %v972 = vpop.permute.xlu0 %971
      %973 = vrot.lane.b32.xlu0 %v840, 16
      %v974 = vpop.permute.xlu0 %973
      %975 = vrot.lane.b32.xlu0 %v845, 16
      %v976 = vpop.permute.xlu0 %975
      %977 = vrot.lane.b32.xlu0 %v848, 16
      %v978 = vpop.permute.xlu0 %977
      %979 = vrot.lane.b32.xlu0 %v853, 16
      %v980 = vpop.permute.xlu0 %979
      %981 = vrot.lane.b32.xlu0 %v856, 16
      %v982 = vpop.permute.xlu0 %981
      %983 = vrot.lane.b32.xlu0 %v861, 16
      %v984 = vpop.permute.xlu0 %983
      %985 = vrot.lane.b32.xlu0 %v864, 16
      %v986 = vpop.permute.xlu0 %985
      %987 = vrot.lane.b32.xlu0 %v869, 16
      %v988 = vpop.permute.xlu0 %987
      %989 = vrot.lane.b32.xlu0 %v872, 16
      %v990 = vpop.permute.xlu0 %989
      %991 = vrot.lane.b32.xlu0 %v877, 16
      %v992 = vpop.permute.xlu0 %991
      %993 = vrot.lane.b32.xlu0 %v880, 16
      %v994 = vpop.permute.xlu0 %993
      %995 = vrot.lane.b32.xlu0 %v885, 16
      %v996 = vpop.permute.xlu0 %995
      %997 = vrot.lane.b32.xlu0 %v888, 16
      %v998 = vpop.permute.xlu0 %997
      %999 = vrot.lane.b32.xlu0 %v893, 16
      %v1000 = vpop.permute.xlu0 %999
      %1001 = vrot.lane.b32.xlu0 %v896, 16
      %v1002 = vpop.permute.xlu0 %1001
      %1003 = vrot.lane.b32.xlu0 %v901, 16
      %v1004 = vpop.permute.xlu0 %1003
      %1005 = vrot.lane.b32.xlu0 %v904, 16
      %v1006 = vpop.permute.xlu0 %1005
      %1007 = vrot.lane.b32.xlu0 %v909, 16
      %v1008 = vpop.permute.xlu0 %1007
      %1009 = vrot.lane.b32.xlu0 %v912, 16
      %v1010 = vpop.permute.xlu0 %1009
      %v1043 = vadd.f32 %v459, %v948
      %v1044 = vadd.f32 %v462, %v950
      %v1045 = vadd.f32 %v467, %v952
      %v1046 = vadd.f32 %v470, %v954
      %v1047 = vadd.f32 %v475, %v956
      %v1048 = vadd.f32 %v478, %v958
      %v1049 = vadd.f32 %v483, %v960
      %v1050 = vadd.f32 %v486, %v962
      %v1051 = vadd.f32 %v491, %v964
      %v1052 = vadd.f32 %v494, %v966
      %v1053 = vadd.f32 %v499, %v968
      %v1054 = vadd.f32 %v502, %v970
      %v1055 = vadd.f32 %v507, %v972
      %v1056 = vadd.f32 %v510, %v974
      %v1057 = vadd.f32 %v515, %v976
      %v1058 = vadd.f32 %v518, %v978
      %v1059 = vadd.f32 %v523, %v980
      %v1060 = vadd.f32 %v526, %v982
      %v1061 = vadd.f32 %v531, %v984
      %v1062 = vadd.f32 %v534, %v986
      %v1063 = vadd.f32 %v539, %v988
      %v1064 = vadd.f32 %v542, %v990
      %v1065 = vadd.f32 %v547, %v992
      %v1066 = vadd.f32 %v550, %v994
      %v1067 = vadd.f32 %v555, %v996
      %v1068 = vadd.f32 %v558, %v998
      %v1069 = vadd.f32 %v563, %v1000
      %v1070 = vadd.f32 %v566, %v1002
      %v1071 = vadd.f32 %v571, %v1004
      %v1072 = vadd.f32 %v574, %v1006
      %v1073 = vadd.f32 %v579, %v1008
      %v1074 = vadd.f32 %v582, %v1010
      %v1075 = vxor.u32 %v1043, 2147483648
      %v1076 = vxor.u32 %v1044, 2147483648
      %v1077 = vxor.u32 %v1045, 2147483648
      %v1078 = vxor.u32 %v1046, 2147483648
      %v1079 = vxor.u32 %v1047, 2147483648
      %v1080 = vxor.u32 %v1048, 2147483648
      %v1081 = vxor.u32 %v1049, 2147483648
      %v1082 = vxor.u32 %v1050, 2147483648
      %v1083 = vxor.u32 %v1051, 2147483648
      %v1084 = vxor.u32 %v1052, 2147483648
      %v1085 = vxor.u32 %v1053, 2147483648
      %v1086 = vxor.u32 %v1054, 2147483648
      %v1087 = vxor.u32 %v1055, 2147483648
      %v1088 = vxor.u32 %v1056, 2147483648
      %v1089 = vxor.u32 %v1057, 2147483648
      %v1090 = vxor.u32 %v1058, 2147483648
      %v1091 = vxor.u32 %v1059, 2147483648
      %v1092 = vxor.u32 %v1060, 2147483648
      %v1093 = vxor.u32 %v1061, 2147483648
      %v1094 = vxor.u32 %v1062, 2147483648
      %v1095 = vxor.u32 %v1063, 2147483648
      %v1096 = vxor.u32 %v1064, 2147483648
      %v1097 = vxor.u32 %v1065, 2147483648
      %v1098 = vxor.u32 %v1066, 2147483648
      %v1099 = vxor.u32 %v1067, 2147483648
      %v1100 = vxor.u32 %v1068, 2147483648
      %v1101 = vxor.u32 %v1069, 2147483648
      %v1102 = vxor.u32 %v1070, 2147483648
      %v1103 = vxor.u32 %v1071, 2147483648
      %v1104 = vxor.u32 %v1072, 2147483648
      %v1105 = vxor.u32 %v1073, 2147483648
      %v1106 = vxor.u32 %v1074, 2147483648
      %v1107 = vmul.f32 %v1075, 1.442695
      %v1108 = vpow.pop %v1107
      %v1109 = vmul.f32 %v1076, 1.442695
      %v1110 = vpow.pop %v1109
      %v1111 = vmul.f32 %v1077, 1.442695
      %v1112 = vpow.pop %v1111
      %v1113 = vmul.f32 %v1078, 1.442695
      %v1114 = vpow.pop %v1113
      %v1115 = vmul.f32 %v1079, 1.442695
      %v1116 = vpow.pop %v1115
      %v1117 = vmul.f32 %v1080, 1.442695
      %v1118 = vpow.pop %v1117
      %v1119 = vmul.f32 %v1081, 1.442695
      %v1120 = vpow.pop %v1119
      %v1121 = vmul.f32 %v1082, 1.442695
      %v1122 = vpow.pop %v1121
      %v1123 = vmul.f32 %v1083, 1.442695
      %v1124 = vpow.pop %v1123
      %v1125 = vmul.f32 %v1084, 1.442695
      %v1126 = vpow.pop %v1125
      %v1127 = vmul.f32 %v1085, 1.442695
      %v1128 = vpow.pop %v1127
      %v1129 = vmul.f32 %v1086, 1.442695
      %v1130 = vpow.pop %v1129
      %v1131 = vmul.f32 %v1087, 1.442695
      %v1132 = vpow.pop %v1131
      %v1133 = vmul.f32 %v1088, 1.442695
      %v1134 = vpow.pop %v1133
      %v1135 = vmul.f32 %v1089, 1.442695
      %v1136 = vpow.pop %v1135
      %v1137 = vmul.f32 %v1090, 1.442695
      %v1138 = vpow.pop %v1137
      %v1139 = vmul.f32 %v1091, 1.442695
      %v1140 = vpow.pop %v1139
      %v1141 = vmul.f32 %v1092, 1.442695
      %v1142 = vpow.pop %v1141
      %v1143 = vmul.f32 %v1093, 1.442695
      %v1144 = vpow.pop %v1143
      %v1145 = vmul.f32 %v1094, 1.442695
      %v1146 = vpow.pop %v1145
      %v1147 = vmul.f32 %v1095, 1.442695
      %v1148 = vpow.pop %v1147
      %v1149 = vmul.f32 %v1096, 1.442695
      %v1150 = vpow.pop %v1149
      %v1151 = vmul.f32 %v1097, 1.442695
      %v1152 = vpow.pop %v1151
      %v1153 = vmul.f32 %v1098, 1.442695
      %v1154 = vpow.pop %v1153
      %v1155 = vmul.f32 %v1099, 1.442695
      %v1156 = vpow.pop %v1155
      %v1157 = vmul.f32 %v1100, 1.442695
      %v1158 = vpow.pop %v1157
      %v1159 = vmul.f32 %v1101, 1.442695
      %v1160 = vpow.pop %v1159
      %v1161 = vmul.f32 %v1102, 1.442695
      %v1162 = vpow.pop %v1161
      %v1163 = vmul.f32 %v1103, 1.442695
      %v1164 = vpow.pop %v1163
      %v1165 = vmul.f32 %v1104, 1.442695
      %v1166 = vpow.pop %v1165
      %v1167 = vmul.f32 %v1105, 1.442695
      %v1168 = vpow.pop %v1167
      %v1169 = vmul.f32 %v1106, 1.442695
      %v1170 = vpow.pop %v1169
      %v1171 = vadd.f32 %v1108, 1.0
      %v1172 = vadd.f32 %v1110, 1.0
      %v1173 = vadd.f32 %v1112, 1.0
      %v1174 = vadd.f32 %v1114, 1.0
      %v1175 = vadd.f32 %v1116, 1.0
      %v1176 = vadd.f32 %v1118, 1.0
      %v1177 = vadd.f32 %v1120, 1.0
      %v1178 = vadd.f32 %v1122, 1.0
      %v1179 = vadd.f32 %v1124, 1.0
      %v1180 = vadd.f32 %v1126, 1.0
      %v1181 = vadd.f32 %v1128, 1.0
      %v1182 = vadd.f32 %v1130, 1.0
      %v1183 = vadd.f32 %v1132, 1.0
      %v1184 = vadd.f32 %v1134, 1.0
      %v1185 = vadd.f32 %v1136, 1.0
      %v1186 = vadd.f32 %v1138, 1.0
      %v1187 = vadd.f32 %v1140, 1.0
      %v1188 = vadd.f32 %v1142, 1.0
      %v1189 = vadd.f32 %v1144, 1.0
      %v1190 = vadd.f32 %v1146, 1.0
      %v1191 = vadd.f32 %v1148, 1.0
      %v1192 = vadd.f32 %v1150, 1.0
      %v1193 = vadd.f32 %v1152, 1.0
      %v1194 = vadd.f32 %v1154, 1.0
      %v1195 = vadd.f32 %v1156, 1.0
      %v1196 = vadd.f32 %v1158, 1.0
      %v1197 = vadd.f32 %v1160, 1.0
      %v1198 = vadd.f32 %v1162, 1.0
      %v1199 = vadd.f32 %v1164, 1.0
      %v1200 = vadd.f32 %v1166, 1.0
      %v1201 = vadd.f32 %v1168, 1.0
      %v1202 = vadd.f32 %v1170, 1.0
      %v1203 = vrcp.pop %v1171
      %v1204 = vmul.f32 1.0, %v1203
      %v1205 = vrcp.pop %v1172
      %v1206 = vmul.f32 1.0, %v1205
      %v1207 = vrcp.pop %v1173
      %v1208 = vmul.f32 1.0, %v1207
      %v1209 = vrcp.pop %v1174
      %v1210 = vmul.f32 1.0, %v1209
      %v1211 = vrcp.pop %v1175
      %v1212 = vmul.f32 1.0, %v1211
      %v1213 = vrcp.pop %v1176
      %v1214 = vmul.f32 1.0, %v1213
      %v1215 = vrcp.pop %v1177
      %v1216 = vmul.f32 1.0, %v1215
      %v1217 = vrcp.pop %v1178
      %v1218 = vmul.f32 1.0, %v1217
      %v1219 = vrcp.pop %v1179
      %v1220 = vmul.f32 1.0, %v1219
      %v1221 = vrcp.pop %v1180
      %v1222 = vmul.f32 1.0, %v1221
      %v1223 = vrcp.pop %v1181
      %v1224 = vmul.f32 1.0, %v1223
      %v1225 = vrcp.pop %v1182
      %v1226 = vmul.f32 1.0, %v1225
      %v1227 = vrcp.pop %v1183
      %v1228 = vmul.f32 1.0, %v1227
      %v1229 = vrcp.pop %v1184
      %v1230 = vmul.f32 1.0, %v1229
      %v1231 = vrcp.pop %v1185
      %v1232 = vmul.f32 1.0, %v1231
      %v1233 = vrcp.pop %v1186
      %v1234 = vmul.f32 1.0, %v1233
      %v1235 = vrcp.pop %v1187
      %v1236 = vmul.f32 1.0, %v1235
      %v1237 = vrcp.pop %v1188
      %v1238 = vmul.f32 1.0, %v1237
      %v1239 = vrcp.pop %v1189
      %v1240 = vmul.f32 1.0, %v1239
      %v1241 = vrcp.pop %v1190
      %v1242 = vmul.f32 1.0, %v1241
      %v1243 = vrcp.pop %v1191
      %v1244 = vmul.f32 1.0, %v1243
      %v1245 = vrcp.pop %v1192
      %v1246 = vmul.f32 1.0, %v1245
      %v1247 = vrcp.pop %v1193
      %v1248 = vmul.f32 1.0, %v1247
      %v1249 = vrcp.pop %v1194
      %v1250 = vmul.f32 1.0, %v1249
      %v1251 = vrcp.pop %v1195
      %v1252 = vmul.f32 1.0, %v1251
      %v1253 = vrcp.pop %v1196
      %v1254 = vmul.f32 1.0, %v1253
      %v1255 = vrcp.pop %v1197
      %v1256 = vmul.f32 1.0, %v1255
      %v1257 = vrcp.pop %v1198
      %v1258 = vmul.f32 1.0, %v1257
      %v1259 = vrcp.pop %v1199
      %v1260 = vmul.f32 1.0, %v1259
      %v1261 = vrcp.pop %v1200
      %v1262 = vmul.f32 1.0, %v1261
      %v1263 = vrcp.pop %v1201
      %v1264 = vmul.f32 1.0, %v1263
      %v1265 = vrcp.pop %v1202
      %v1266 = vmul.f32 1.0, %v1265
      %1268 = vset.pattern.permute.xlu0 16
      %1269 = vperm.xlu0 %1268, %v1204
      %v1270 = vpop.permute.xlu0 %1269
      %1273 = vset.pattern.permute.xlu0 16
      %1274 = vperm.xlu0 %1273, %v1206
      %v1275 = vpop.permute.xlu0 %1274
      %1278 = vset.pattern.permute.xlu0 16
      %1279 = vperm.xlu0 %1278, %v1208
      %v1280 = vpop.permute.xlu0 %1279
      %1283 = vset.pattern.permute.xlu0 16
      %1284 = vperm.xlu0 %1283, %v1210
      %v1285 = vpop.permute.xlu0 %1284
      %1288 = vset.pattern.permute.xlu0 16
      %1289 = vperm.xlu0 %1288, %v1212
      %v1290 = vpop.permute.xlu0 %1289
      %1293 = vset.pattern.permute.xlu0 16
      %1294 = vperm.xlu0 %1293, %v1214
      %v1295 = vpop.permute.xlu0 %1294
      %1298 = vset.pattern.permute.xlu0 16
      %1299 = vperm.xlu0 %1298, %v1216
      %v1300 = vpop.permute.xlu0 %1299
      %1303 = vset.pattern.permute.xlu0 16
      %1304 = vperm.xlu0 %1303, %v1218
      %v1305 = vpop.permute.xlu0 %1304
      %1308 = vset.pattern.permute.xlu0 16
      %1309 = vperm.xlu0 %1308, %v1220
      %v1310 = vpop.permute.xlu0 %1309
      %1313 = vset.pattern.permute.xlu0 16
      %1314 = vperm.xlu0 %1313, %v1222
      %v1315 = vpop.permute.xlu0 %1314
      %1318 = vset.pattern.permute.xlu0 16
      %1319 = vperm.xlu0 %1318, %v1224
      %v1320 = vpop.permute.xlu0 %1319
      %1323 = vset.pattern.permute.xlu0 16
      %1324 = vperm.xlu0 %1323, %v1226
      %v1325 = vpop.permute.xlu0 %1324
      %1328 = vset.pattern.permute.xlu0 16
      %1329 = vperm.xlu0 %1328, %v1228
      %v1330 = vpop.permute.xlu0 %1329
      %1333 = vset.pattern.permute.xlu0 16
      %1334 = vperm.xlu0 %1333, %v1230
      %v1335 = vpop.permute.xlu0 %1334
      %1338 = vset.pattern.permute.xlu0 16
      %1339 = vperm.xlu0 %1338, %v1232
      %v1340 = vpop.permute.xlu0 %1339
      %1343 = vset.pattern.permute.xlu0 16
      %1344 = vperm.xlu0 %1343, %v1234
      %v1345 = vpop.permute.xlu0 %1344
      %1348 = vset.pattern.permute.xlu0 16
      %1349 = vperm.xlu0 %1348, %v1236
      %v1350 = vpop.permute.xlu0 %1349
      %1353 = vset.pattern.permute.xlu0 16
      %1354 = vperm.xlu0 %1353, %v1238
      %v1355 = vpop.permute.xlu0 %1354
      %1358 = vset.pattern.permute.xlu0 16
      %1359 = vperm.xlu0 %1358, %v1240
      %v1360 = vpop.permute.xlu0 %1359
      %1363 = vset.pattern.permute.xlu0 16
      %1364 = vperm.xlu0 %1363, %v1242
      %v1365 = vpop.permute.xlu0 %1364
      %1368 = vset.pattern.permute.xlu0 16
      %1369 = vperm.xlu0 %1368, %v1244
      %v1370 = vpop.permute.xlu0 %1369
      %1373 = vset.pattern.permute.xlu0 16
      %1374 = vperm.xlu0 %1373, %v1246
      %v1375 = vpop.permute.xlu0 %1374
      %1378 = vset.pattern.permute.xlu0 16
      %1379 = vperm.xlu0 %1378, %v1248
      %v1380 = vpop.permute.xlu0 %1379
      %1383 = vset.pattern.permute.xlu0 16
      %1384 = vperm.xlu0 %1383, %v1250
      %v1385 = vpop.permute.xlu0 %1384
      %1388 = vset.pattern.permute.xlu0 16
      %1389 = vperm.xlu0 %1388, %v1252
      %v1390 = vpop.permute.xlu0 %1389
      %1393 = vset.pattern.permute.xlu0 16
      %1394 = vperm.xlu0 %1393, %v1254
      %v1395 = vpop.permute.xlu0 %1394
      %1398 = vset.pattern.permute.xlu0 16
      %1399 = vperm.xlu0 %1398, %v1256
      %v1400 = vpop.permute.xlu0 %1399
      %1403 = vset.pattern.permute.xlu0 16
      %1404 = vperm.xlu0 %1403, %v1258
      %v1405 = vpop.permute.xlu0 %1404
      %1408 = vset.pattern.permute.xlu0 16
      %1409 = vperm.xlu0 %1408, %v1260
      %v1410 = vpop.permute.xlu0 %1409
      %1413 = vset.pattern.permute.xlu0 16
      %1414 = vperm.xlu0 %1413, %v1262
      %v1415 = vpop.permute.xlu0 %1414
      %1418 = vset.pattern.permute.xlu0 16
      %1419 = vperm.xlu0 %1418, %v1264
      %v1420 = vpop.permute.xlu0 %1419
      %1423 = vset.pattern.permute.xlu0 16
      %1424 = vperm.xlu0 %1423, %v1266
      %v1425 = vpop.permute.xlu0 %1424
      %v1427 = vmul.f32 %v459, %v1270
      %v1428 = vmul.f32 %v462, %v1275
      %v1429 = vmul.f32 %v467, %v1280
      %v1430 = vmul.f32 %v470, %v1285
      %v1431 = vmul.f32 %v475, %v1290
      %v1432 = vmul.f32 %v478, %v1295
      %v1433 = vmul.f32 %v483, %v1300
      %v1434 = vmul.f32 %v486, %v1305
      %v1435 = vmul.f32 %v491, %v1310
      %v1436 = vmul.f32 %v494, %v1315
      %v1437 = vmul.f32 %v499, %v1320
      %v1438 = vmul.f32 %v502, %v1325
      %v1439 = vmul.f32 %v507, %v1330
      %v1440 = vmul.f32 %v510, %v1335
      %v1441 = vmul.f32 %v515, %v1340
      %v1442 = vmul.f32 %v518, %v1345
      %v1443 = vmul.f32 %v523, %v1350
      %v1444 = vmul.f32 %v526, %v1355
      %v1445 = vmul.f32 %v531, %v1360
      %v1446 = vmul.f32 %v534, %v1365
      %v1447 = vmul.f32 %v539, %v1370
      %v1448 = vmul.f32 %v542, %v1375
      %v1449 = vmul.f32 %v547, %v1380
      %v1450 = vmul.f32 %v550, %v1385
      %v1451 = vmul.f32 %v555, %v1390
      %v1452 = vmul.f32 %v558, %v1395
      %v1453 = vmul.f32 %v563, %v1400
      %v1454 = vmul.f32 %v566, %v1405
      %v1455 = vmul.f32 %v571, %v1410
      %v1456 = vmul.f32 %v574, %v1415
      %v1457 = vmul.f32 %v579, %v1420
      %v1458 = vmul.f32 %v582, %v1425
      %v1459 = vunpack.c.l.bf16 %v585
      %v1460 = vunpack.c.l.bf16 %v586
      %v1461 = vunpack.c.l.bf16 %v587
      %v1462 = vunpack.c.l.bf16 %v588
      %v1463 = vunpack.c.l.bf16 %v589
      %v1464 = vunpack.c.l.bf16 %v590
      %v1465 = vunpack.c.l.bf16 %v591
      %v1466 = vunpack.c.l.bf16 %v592
      %v1467 = vunpack.c.l.bf16 %v593
      %v1468 = vunpack.c.l.bf16 %v594
      %v1469 = vunpack.c.l.bf16 %v595
      %v1470 = vunpack.c.l.bf16 %v596
      %v1471 = vunpack.c.l.bf16 %v597
      %v1472 = vunpack.c.l.bf16 %v598
      %v1473 = vunpack.c.l.bf16 %v599
      %v1474 = vunpack.c.l.bf16 %v600
      %v1475 = vunpack.c.l.bf16 %v601
      %v1476 = vunpack.c.l.bf16 %v602
      %v1477 = vunpack.c.l.bf16 %v603
      %v1478 = vunpack.c.l.bf16 %v604
      %v1479 = vunpack.c.l.bf16 %v605
      %v1480 = vunpack.c.l.bf16 %v606
      %v1481 = vunpack.c.l.bf16 %v607
      %v1482 = vunpack.c.l.bf16 %v608
      %v1483 = vunpack.c.l.bf16 %v609
      %v1484 = vunpack.c.l.bf16 %v610
      %v1485 = vunpack.c.l.bf16 %v611
      %v1486 = vunpack.c.l.bf16 %v612
      %v1487 = vunpack.c.l.bf16 %v613
      %v1488 = vunpack.c.l.bf16 %v614
      %v1489 = vunpack.c.l.bf16 %v615
      %v1490 = vunpack.c.l.bf16 %v616
      %1491 = vset.pattern.permute.xlu0 17
      %1492 = vperm.xlu0 %1491, %v1204
      %v1493 = vpop.permute.xlu0 %1492
      %1495 = vset.pattern.permute.xlu0 17
      %1496 = vperm.xlu0 %1495, %v1206
      %v1497 = vpop.permute.xlu0 %1496
      %1499 = vset.pattern.permute.xlu0 17
      %1500 = vperm.xlu0 %1499, %v1208
      %v1501 = vpop.permute.xlu0 %1500
      %1503 = vset.pattern.permute.xlu0 17
      %1504 = vperm.xlu0 %1503, %v1210
      %v1505 = vpop.permute.xlu0 %1504
      %1507 = vset.pattern.permute.xlu0 17
      %1508 = vperm.xlu0 %1507, %v1212
      %v1509 = vpop.permute.xlu0 %1508
      %1511 = vset.pattern.permute.xlu0 17
      %1512 = vperm.xlu0 %1511, %v1214
      %v1513 = vpop.permute.xlu0 %1512
      %1515 = vset.pattern.permute.xlu0 17
      %1516 = vperm.xlu0 %1515, %v1216
      %v1517 = vpop.permute.xlu0 %1516
      %1519 = vset.pattern.permute.xlu0 17
      %1520 = vperm.xlu0 %1519, %v1218
      %v1521 = vpop.permute.xlu0 %1520
      %1523 = vset.pattern.permute.xlu0 17
      %1524 = vperm.xlu0 %1523, %v1220
      %v1525 = vpop.permute.xlu0 %1524
      %1527 = vset.pattern.permute.xlu0 17
      %1528 = vperm.xlu0 %1527, %v1222
      %v1529 = vpop.permute.xlu0 %1528
      %1531 = vset.pattern.permute.xlu0 17
      %1532 = vperm.xlu0 %1531, %v1224
      %v1533 = vpop.permute.xlu0 %1532
      %1535 = vset.pattern.permute.xlu0 17
      %1536 = vperm.xlu0 %1535, %v1226
      %v1537 = vpop.permute.xlu0 %1536
      %1539 = vset.pattern.permute.xlu0 17
      %1540 = vperm.xlu0 %1539, %v1228
      %v1541 = vpop.permute.xlu0 %1540
      %1543 = vset.pattern.permute.xlu0 17
      %1544 = vperm.xlu0 %1543, %v1230
      %v1545 = vpop.permute.xlu0 %1544
      %1547 = vset.pattern.permute.xlu0 17
      %1548 = vperm.xlu0 %1547, %v1232
      %v1549 = vpop.permute.xlu0 %1548
      %1551 = vset.pattern.permute.xlu0 17
      %1552 = vperm.xlu0 %1551, %v1234
      %v1553 = vpop.permute.xlu0 %1552
      %1555 = vset.pattern.permute.xlu0 17
      %1556 = vperm.xlu0 %1555, %v1236
      %v1557 = vpop.permute.xlu0 %1556
      %1559 = vset.pattern.permute.xlu0 17
      %1560 = vperm.xlu0 %1559, %v1238
      %v1561 = vpop.permute.xlu0 %1560
      %1563 = vset.pattern.permute.xlu0 17
      %1564 = vperm.xlu0 %1563, %v1240
      %v1565 = vpop.permute.xlu0 %1564
      %1567 = vset.pattern.permute.xlu0 17
      %1568 = vperm.xlu0 %1567, %v1242
      %v1569 = vpop.permute.xlu0 %1568
      %1571 = vset.pattern.permute.xlu0 17
      %1572 = vperm.xlu0 %1571, %v1244
      %v1573 = vpop.permute.xlu0 %1572
      %1575 = vset.pattern.permute.xlu0 17
      %1576 = vperm.xlu0 %1575, %v1246
      %v1577 = vpop.permute.xlu0 %1576
      %1579 = vset.pattern.permute.xlu0 17
      %1580 = vperm.xlu0 %1579, %v1248
      %v1581 = vpop.permute.xlu0 %1580
      %1583 = vset.pattern.permute.xlu0 17
      %1584 = vperm.xlu0 %1583, %v1250
      %v1585 = vpop.permute.xlu0 %1584
      %1587 = vset.pattern.permute.xlu0 17
      %1588 = vperm.xlu0 %1587, %v1252
      %v1589 = vpop.permute.xlu0 %1588
      %1591 = vset.pattern.permute.xlu0 17
      %1592 = vperm.xlu0 %1591, %v1254
      %v1593 = vpop.permute.xlu0 %1592
      %1595 = vset.pattern.permute.xlu0 17
      %1596 = vperm.xlu0 %1595, %v1256
      %v1597 = vpop.permute.xlu0 %1596
      %1599 = vset.pattern.permute.xlu0 17
      %1600 = vperm.xlu0 %1599, %v1258
      %v1601 = vpop.permute.xlu0 %1600
      %1603 = vset.pattern.permute.xlu0 17
      %1604 = vperm.xlu0 %1603, %v1260
      %v1605 = vpop.permute.xlu0 %1604
      %1607 = vset.pattern.permute.xlu0 17
      %1608 = vperm.xlu0 %1607, %v1262
      %v1609 = vpop.permute.xlu0 %1608
      %1611 = vset.pattern.permute.xlu0 17
      %1612 = vperm.xlu0 %1611, %v1264
      %v1613 = vpop.permute.xlu0 %1612
      %1615 = vset.pattern.permute.xlu0 17
      %1616 = vperm.xlu0 %1615, %v1266
      %v1617 = vpop.permute.xlu0 %1616
      %v1619 = vmul.f32 %v1459, %v1493
      %v1620 = vmul.f32 %v1460, %v1497
      %v1621 = vmul.f32 %v1461, %v1501
      %v1622 = vmul.f32 %v1462, %v1505
      %v1623 = vmul.f32 %v1463, %v1509
      %v1624 = vmul.f32 %v1464, %v1513
      %v1625 = vmul.f32 %v1465, %v1517
      %v1626 = vmul.f32 %v1466, %v1521
      %v1627 = vmul.f32 %v1467, %v1525
      %v1628 = vmul.f32 %v1468, %v1529
      %v1629 = vmul.f32 %v1469, %v1533
      %v1630 = vmul.f32 %v1470, %v1537
      %v1631 = vmul.f32 %v1471, %v1541
      %v1632 = vmul.f32 %v1472, %v1545
      %v1633 = vmul.f32 %v1473, %v1549
      %v1634 = vmul.f32 %v1474, %v1553
      %v1635 = vmul.f32 %v1475, %v1557
      %v1636 = vmul.f32 %v1476, %v1561
      %v1637 = vmul.f32 %v1477, %v1565
      %v1638 = vmul.f32 %v1478, %v1569
      %v1639 = vmul.f32 %v1479, %v1573
      %v1640 = vmul.f32 %v1480, %v1577
      %v1641 = vmul.f32 %v1481, %v1581
      %v1642 = vmul.f32 %v1482, %v1585
      %v1643 = vmul.f32 %v1483, %v1589
      %v1644 = vmul.f32 %v1484, %v1593
      %v1645 = vmul.f32 %v1485, %v1597
      %v1646 = vmul.f32 %v1486, %v1601
      %v1647 = vmul.f32 %v1487, %v1605
      %v1648 = vmul.f32 %v1488, %v1609
      %v1649 = vmul.f32 %v1489, %v1613
      %v1650 = vmul.f32 %v1490, %v1617
      %v1651 = vadd.f32 %v1427, %v1619
      %v1652 = vadd.f32 %v1428, %v1620
      %v1653 = vadd.f32 %v1429, %v1621
      %v1654 = vadd.f32 %v1430, %v1622
      %v1655 = vadd.f32 %v1431, %v1623
      %v1656 = vadd.f32 %v1432, %v1624
      %v1657 = vadd.f32 %v1433, %v1625
      %v1658 = vadd.f32 %v1434, %v1626
      %v1659 = vadd.f32 %v1435, %v1627
      %v1660 = vadd.f32 %v1436, %v1628
      %v1661 = vadd.f32 %v1437, %v1629
      %v1662 = vadd.f32 %v1438, %v1630
      %v1663 = vadd.f32 %v1439, %v1631
      %v1664 = vadd.f32 %v1440, %v1632
      %v1665 = vadd.f32 %v1441, %v1633
      %v1666 = vadd.f32 %v1442, %v1634
      %v1667 = vadd.f32 %v1443, %v1635
      %v1668 = vadd.f32 %v1444, %v1636
      %v1669 = vadd.f32 %v1445, %v1637
      %v1670 = vadd.f32 %v1446, %v1638
      %v1671 = vadd.f32 %v1447, %v1639
      %v1672 = vadd.f32 %v1448, %v1640
      %v1673 = vadd.f32 %v1449, %v1641
      %v1674 = vadd.f32 %v1450, %v1642
      %v1675 = vadd.f32 %v1451, %v1643
      %v1676 = vadd.f32 %v1452, %v1644
      %v1677 = vadd.f32 %v1453, %v1645
      %v1678 = vadd.f32 %v1454, %v1646
      %v1679 = vadd.f32 %v1455, %v1647
      %v1680 = vadd.f32 %v1456, %v1648
      %v1681 = vadd.f32 %v1457, %v1649
      %v1682 = vadd.f32 %v1458, %v1650
      %v1683 = vpack.c.bf16 %v1652, %v1651
      %v1684 = vpack.c.bf16 %v1654, %v1653
      %v1685 = vpack.c.bf16 %v1656, %v1655
      %v1686 = vpack.c.bf16 %v1658, %v1657
      %v1687 = vpack.c.bf16 %v1660, %v1659
      %v1688 = vpack.c.bf16 %v1662, %v1661
      %v1689 = vpack.c.bf16 %v1664, %v1663
      %v1690 = vpack.c.bf16 %v1666, %v1665
      %v1691 = vpack.c.bf16 %v1668, %v1667
      %v1692 = vpack.c.bf16 %v1670, %v1669
      %v1693 = vpack.c.bf16 %v1672, %v1671
      %v1694 = vpack.c.bf16 %v1674, %v1673
      %v1695 = vpack.c.bf16 %v1676, %v1675
      %v1696 = vpack.c.bf16 %v1678, %v1677
      %v1697 = vpack.c.bf16 %v1680, %v1679
      %v1698 = vpack.c.bf16 %v1682, %v1681
      %v1715 = vunpack.c.l.b16 %v1683
      %v1716 = vunpack.c.h.b16 %v1683
      %v1717 = vunpack.c.l.b16 %v1684
      %v1718 = vunpack.c.h.b16 %v1684
      %v1719 = vunpack.c.l.b16 %v1685
      %v1720 = vunpack.c.h.b16 %v1685
      %v1721 = vunpack.c.l.b16 %v1686
      %v1722 = vunpack.c.h.b16 %v1686
      %v1723 = vunpack.c.l.b16 %v1687
      %v1724 = vunpack.c.h.b16 %v1687
      %v1725 = vunpack.c.l.b16 %v1688
      %v1726 = vunpack.c.h.b16 %v1688
      %v1727 = vunpack.c.l.b16 %v1689
      %v1728 = vunpack.c.h.b16 %v1689
      %v1729 = vunpack.c.l.b16 %v1690
      %v1730 = vunpack.c.h.b16 %v1690
      %v1731 = vunpack.c.l.b16 %v1691
      %v1732 = vunpack.c.h.b16 %v1691
      %v1733 = vunpack.c.l.b16 %v1692
      %v1734 = vunpack.c.h.b16 %v1692
      %v1735 = vunpack.c.l.b16 %v1693
      %v1736 = vunpack.c.h.b16 %v1693
      %v1737 = vunpack.c.l.b16 %v1694
      %v1738 = vunpack.c.h.b16 %v1694
      %v1739 = vunpack.c.l.b16 %v1695
      %v1740 = vunpack.c.h.b16 %v1695
      %v1741 = vunpack.c.l.b16 %v1696
      %v1742 = vunpack.c.h.b16 %v1696
      %v1743 = vunpack.c.l.b16 %v1697
      %v1744 = vunpack.c.h.b16 %v1697
      %v1745 = vunpack.c.l.b16 %v1698
      %v1746 = vunpack.c.h.b16 %v1698
      %v1747 = vpack.c.b16 %v1715, %v1715
      %v1748 = vpack.c.b16 %v1716, %v1716
      %v1749 = vpack.c.b16 %v1717, %v1717
      %v1750 = vpack.c.b16 %v1718, %v1718
      %v1751 = vpack.c.b16 %v1719, %v1719
      %v1752 = vpack.c.b16 %v1720, %v1720
      %v1753 = vpack.c.b16 %v1721, %v1721
      %v1754 = vpack.c.b16 %v1722, %v1722
      %v1755 = vpack.c.b16 %v1723, %v1723
      %v1756 = vpack.c.b16 %v1724, %v1724
      %v1757 = vpack.c.b16 %v1725, %v1725
      %v1758 = vpack.c.b16 %v1726, %v1726
      %v1759 = vpack.c.b16 %v1727, %v1727
      %v1760 = vpack.c.b16 %v1728, %v1728
      %v1761 = vpack.c.b16 %v1729, %v1729
      %v1762 = vpack.c.b16 %v1730, %v1730
      %v1763 = vpack.c.b16 %v1731, %v1731
      %v1764 = vpack.c.b16 %v1732, %v1732
      %v1765 = vpack.c.b16 %v1733, %v1733
      %v1766 = vpack.c.b16 %v1734, %v1734
      %v1767 = vpack.c.b16 %v1735, %v1735
      %v1768 = vpack.c.b16 %v1736, %v1736
      %v1769 = vpack.c.b16 %v1737, %v1737
      %v1770 = vpack.c.b16 %v1738, %v1738
      %v1771 = vpack.c.b16 %v1739, %v1739
      %v1772 = vpack.c.b16 %v1740, %v1740
      %v1773 = vpack.c.b16 %v1741, %v1741
      %v1774 = vpack.c.b16 %v1742, %v1742
      %v1775 = vpack.c.b16 %v1743, %v1743
      %v1776 = vpack.c.b16 %v1744, %v1744
      %v1777 = vpack.c.b16 %v1745, %v1745
      %v1778 = vpack.c.b16 %v1746, %v1746
      %vm1811 = vcmask 125952
      %1812 = vst.msk [vmem:[%s248] sm:$0xf] %vm1811, %v1747
      %1813 = vst.msk [vmem:[%s248 + $0x4] sm:$0xf] %vm1811, %v1748
      %1814 = vst.msk [vmem:[%s248 + $0x8] sm:$0xf] %vm1811, %v1749
      %1815 = vst.msk [vmem:[%s248 + $0xc] sm:$0xf] %vm1811, %v1750
      %1816 = vst.msk [vmem:[%s248 + $0x10] sm:$0xf] %vm1811, %v1751
      %1817 = vst.msk [vmem:[%s248 + $0x14] sm:$0xf] %vm1811, %v1752
      %1818 = vst.msk [vmem:[%s248 + $0x18] sm:$0xf] %vm1811, %v1753
      %1819 = vst.msk [vmem:[%s248 + $0x1c] sm:$0xf] %vm1811, %v1754
      %1820 = vst.msk [vmem:[%s248 + $0x20] sm:$0xf] %vm1811, %v1755
      %1821 = vst.msk [vmem:[%s248 + $0x24] sm:$0xf] %vm1811, %v1756
      %1822 = vst.msk [vmem:[%s248 + $0x28] sm:$0xf] %vm1811, %v1757
      %1823 = vst.msk [vmem:[%s248 + $0x2c] sm:$0xf] %vm1811, %v1758
      %1824 = vst.msk [vmem:[%s248 + $0x30] sm:$0xf] %vm1811, %v1759
      %1825 = vst.msk [vmem:[%s248 + $0x34] sm:$0xf] %vm1811, %v1760
      %1826 = vst.msk [vmem:[%s248 + $0x38] sm:$0xf] %vm1811, %v1761
      %1827 = vst.msk [vmem:[%s248 + $0x3c] sm:$0xf] %vm1811, %v1762
      %1828 = vst.msk [vmem:[%s248 + $0x40] sm:$0xf] %vm1811, %v1763
      %1829 = vst.msk [vmem:[%s248 + $0x44] sm:$0xf] %vm1811, %v1764
      %1830 = vst.msk [vmem:[%s248 + $0x48] sm:$0xf] %vm1811, %v1765
      %1831 = vst.msk [vmem:[%s248 + $0x4c] sm:$0xf] %vm1811, %v1766
      %1832 = vst.msk [vmem:[%s248 + $0x50] sm:$0xf] %vm1811, %v1767
      %1833 = vst.msk [vmem:[%s248 + $0x54] sm:$0xf] %vm1811, %v1768
      %1834 = vst.msk [vmem:[%s248 + $0x58] sm:$0xf] %vm1811, %v1769
      %1835 = vst.msk [vmem:[%s248 + $0x5c] sm:$0xf] %vm1811, %v1770
      %1836 = vst.msk [vmem:[%s248 + $0x60] sm:$0xf] %vm1811, %v1771
      %1837 = vst.msk [vmem:[%s248 + $0x64] sm:$0xf] %vm1811, %v1772
      %1838 = vst.msk [vmem:[%s248 + $0x68] sm:$0xf] %vm1811, %v1773
      %1839 = vst.msk [vmem:[%s248 + $0x6c] sm:$0xf] %vm1811, %v1774
      %1840 = vst.msk [vmem:[%s248 + $0x70] sm:$0xf] %vm1811, %v1775
      %1841 = vst.msk [vmem:[%s248 + $0x74] sm:$0xf] %vm1811, %v1776
      %1842 = vst.msk [vmem:[%s248 + $0x78] sm:$0xf] %vm1811, %v1777
      %1843 = vst.msk [vmem:[%s248 + $0x7c] sm:$0xf] %vm1811, %v1778
      %s1844 = smul.u32 32, %s16
      %p1845 = scmp.lt.s32.totalorder %s1844, 63
      %s1846 = scalar_select %p1845, %s1844, 63
      %s1847 = smul.addr %s1846, 4
      %s1848 = scalar_lea.vmem %s5, %s1847
      // Predicated region
      $region41: #{tpu_custom_call.1} parent=39 // pred_check
        %p1849 = pneg %p149
      $region42: #{tpu_custom_call.1} parent=39 // pred_check_branch
        %1851 = sbr.rel (%p1849) target = $region44
      $region43: #{tpu_custom_call.1} parent=39 // pred_region
        %s1852 = smul.u32 32, %s16
      $region44: #{tpu_custom_call.1} parent=39 // pred_fallthru
        _
    $region40: #{tpu_custom_call.1} parent=5 // pred_fallthru
      _
    %p1853 = scmp.le.s32.totalorder 2, %s11
    // Predicated region
    $region45: #{tpu_custom_call.1} parent=5 // pred_check
      %p1854 = pneg %p1853
    $region46: #{tpu_custom_call.1} parent=5 // pred_check_branch
      %1856 = sbr.rel (%p1854) target = $region48
    $region47: #{tpu_custom_call.1} parent=5 // pred_region
      %s1857 = ssub.s32 %s11, 2
      // Predicated region
      $region49: #{tpu_custom_call.1} parent=47 // pred_check
        %p1858 = pneg %p155
      $region50: #{tpu_custom_call.1} parent=47 // pred_check_branch
        %1860 = sbr.rel (%p1858) target = $region52
      $region51: #{tpu_custom_call.1} parent=47 // pred_region
        %s1861 = smul.u32 32, %s17
        %p1862 = scmp.lt.s32.totalorder %s1861, 63
        %s1863 = scalar_select %p1862, %s1861, 63
        %s1864 = smul.addr %s1863, 4
        %s1865 = scalar_lea.vmem %s5, %s1864
      $region52: #{tpu_custom_call.1} parent=47 // pred_fallthru
        _
    $region48: #{tpu_custom_call.1} parent=5 // pred_fallthru
      _
  $region6: #{tpu_custom_call.1} parent=0 // loop_footer
    %s15 = sadd.s32 1, %s11
  $region7: #{tpu_custom_call.1} parent=0 // loop_footer_branch
    %10 = sbr.rel target = $region3
  $region8: #{tpu_custom_call.1} parent=0 // loop_exit
    _

</llo_original>
